<compile_context>
chip_gen: v5e
topology: v5e:2x2
jax: 0.10.0
libtpu: 0.0.40
codegen_flags: <defaults>
</compile_context>

<pallas_src>
import functools

import jax
import jax.numpy as jnp
from jax import lax
from jax.experimental import pallas as pl
from jax.experimental.pallas import tpu as pltpu

EPS = 1e-5


def _round_up(x, m):
    return (x + m - 1) // m * m


# ---------------- pass A: per-channel sum / sum-of-squares of x ----------------
def _xstats_kernel(x_ref, stats_ref):
    @pl.when(pl.program_id(0) == 0)
    def _():
        stats_ref[...] = jnp.zeros_like(stats_ref)

    x = x_ref[...].astype(jnp.float32)
    s = jnp.sum(x, axis=0, keepdims=True)
    ss = jnp.sum(x * x, axis=0, keepdims=True)
    stats_ref[...] += jnp.concatenate([s, ss], axis=0)


# ------ pass B: BN1 affine + residual add + relu + 1x1 conv, y statistics ------
def _bn_add_relu_matmul_kernel(scale1_ref, shift1_ref, x_ref, r_ref, w_ref,
                               y_ref, ystats_ref, *, tile_m, m_true, m_pad):
    i = pl.program_id(0)

    @pl.when(i == 0)
    def _():
        ystats_ref[...] = jnp.zeros_like(ystats_ref)

    xn = x_ref[...] * scale1_ref[...] + shift1_ref[...]
    a = jnp.maximum(xn + r_ref[...], 0.0)

    if m_pad != m_true:
        # zero padded rows so they do not pollute the BN2 statistics
        row = lax.broadcasted_iota(jnp.int32, a.shape, 0)
        a = jnp.where(i * tile_m + row < m_true, a, 0.0)

    y = jnp.dot(a.astype(jnp.bfloat16), w_ref[...],
                preferred_element_type=jnp.float32)
    y_ref[...] = y

    s = jnp.sum(y, axis=0, keepdims=True)
    ss = jnp.sum(y * y, axis=0, keepdims=True)
    ystats_ref[...] += jnp.concatenate([s, ss], axis=0)


# -------------- pass C: BN2 folded into a per-channel scale/shift --------------
def _affine_kernel(scale2_ref, shift2_ref, y_ref, o_ref):
    o_ref[...] = (y_ref[...] * scale2_ref[...] + shift2_ref[...]).astype(o_ref.dtype)


def fused_module(x109, x102, gamma1, beta1, conv_w, gamma2, beta2, *,
                 tile_m=128, vmem_limit_bytes=48 * 1024 * 1024):
    """x109, x102: NCHW float32.  conv_w: [Cout, Cin, 1, 1].  Returns NCHW f32."""
    N, Cin, H, W = x109.shape
    Cout = conv_w.shape[0]
    M = N * H * W

    # NCHW -> NHWC -> [M, C]
    # TODO(synk): keep activations NHWC end-to-end in the surrounding model so
    # these extra full-HBM transpose passes disappear.
    x2d = jnp.transpose(x109, (0, 2, 3, 1)).reshape(M, Cin)
    r2d = jnp.transpose(x102, (0, 2, 3, 1)).reshape(M, Cin)
    w2d = jnp.transpose(conv_w.reshape(Cout, Cin), (1, 0))  # [Cin, Cout]

    # Pad to lane/tile-friendly sizes (zero padding keeps stats & matmul exact).
    Cin_p, Cout_p = _round_up(Cin, 128), _round_up(Cout, 128)
    tile_m = min(tile_m, _round_up(M, 8))
    M_p = _round_up(M, tile_m)
    n_tiles = M_p // tile_m

    x2d = jnp.pad(x2d, ((0, M_p - M), (0, Cin_p - Cin)))
    r2d = jnp.pad(r2d, ((0, M_p - M), (0, Cin_p - Cin)))
    w_bf16 = jnp.pad(w2d, ((0, Cin_p - Cin), (0, Cout_p - Cout))).astype(jnp.bfloat16)
    g1 = jnp.pad(gamma1.astype(jnp.float32), (0, Cin_p - Cin))
    b1 = jnp.pad(beta1.astype(jnp.float32), (0, Cin_p - Cin))
    g2 = jnp.pad(gamma2.astype(jnp.float32), (0, Cout_p - Cout))
    b2 = jnp.pad(beta2.astype(jnp.float32), (0, Cout_p - Cout))

    # ---- pass A: BN1 statistics (tiled reduction over M) -------------------
    xstats = pl.pallas_call(
        _xstats_kernel,
        out_shape=jax.ShapeDtypeStruct((2, Cin_p), jnp.float32),
        grid=(n_tiles,),
        in_specs=[pl.BlockSpec((tile_m, Cin_p), lambda i: (i, 0))],
        out_specs=pl.BlockSpec((2, Cin_p), lambda i: (0, 0)),
        compiler_params=pltpu.CompilerParams(
            dimension_semantics=("arbitrary",),
            vmem_limit_bytes=vmem_limit_bytes),
    )(x2d)

    mean1 = xstats[0] / M
    var1 = jnp.maximum(xstats[1] / M - mean1 * mean1, 0.0)
    scale1 = (g1 * lax.rsqrt(var1 + EPS)).reshape(1, Cin_p)
    shift1 = (b1 - mean1 * scale1[0]).reshape(1, Cin_p)

    # ---- pass B: normalize + add + relu + matmul, accumulate BN2 stats -----
    flops = 2 * M_p * Cin_p * Cout_p
    bytes_accessed = (2 * M_p * Cin_p * 4 + Cin_p * Cout_p * 2
                      + M_p * Cout_p * 4 + 4 * (Cin_p + Cout_p) * 4)
    y, ystats = pl.pallas_call(
        functools.partial(_bn_add_relu_matmul_kernel,
                          tile_m=tile_m, m_true=M, m_pad=M_p),
        out_shape=(jax.ShapeDtypeStruct((M_p, Cout_p), jnp.float32),
                   jax.ShapeDtypeStruct((2, Cout_p), jnp.float32)),
        grid=(n_tiles,),
        in_specs=[
            pl.BlockSpec((1, Cin_p), lambda i: (0, 0)),        # scale1 (resident)
            pl.BlockSpec((1, Cin_p), lambda i: (0, 0)),        # shift1 (resident)
            pl.BlockSpec((tile_m, Cin_p), lambda i: (i, 0)),   # x tile
            pl.BlockSpec((tile_m, Cin_p), lambda i: (i, 0)),   # residual tile
            pl.BlockSpec((Cin_p, Cout_p), lambda i: (0, 0)),   # weight (resident)
        ],
        out_specs=(
            pl.BlockSpec((tile_m, Cout_p), lambda i: (i, 0)),  # y tile
            pl.BlockSpec((2, Cout_p), lambda i: (0, 0)),       # y stats (resident)
        ),
        compiler_params=pltpu.CompilerParams(
            dimension_semantics=("arbitrary",),
            vmem_limit_bytes=vmem_limit_bytes),
        cost_estimate=pl.CostEstimate(flops=flops, transcendentals=0,
                                      bytes_accessed=bytes_accessed),
    )(scale1, shift1, x2d, r2d, w_bf16)

    mean2 = ystats[0] / M
    var2 = jnp.maximum(ystats[1] / M - mean2 * mean2, 0.0)
    scale2 = (g2 * lax.rsqrt(var2 + EPS)).reshape(1, Cout_p)
    shift2 = (b2 - mean2 * scale2[0]).reshape(1, Cout_p)

    # ---- pass C: BN2 affine epilogue (pure streaming, megacore-parallel) ----
    out2d = pl.pallas_call(
        _affine_kernel,
        out_shape=jax.ShapeDtypeStruct((M_p, Cout_p), jnp.float32),
        grid=(n_tiles,),
        in_specs=[
            pl.BlockSpec((1, Cout_p), lambda i: (0, 0)),
            pl.BlockSpec((1, Cout_p), lambda i: (0, 0)),
            pl.BlockSpec((tile_m, Cout_p), lambda i: (i, 0)),
        ],
        out_specs=pl.BlockSpec((tile_m, Cout_p), lambda i: (i, 0)),
        compiler_params=pltpu.CompilerParams(
            dimension_semantics=("parallel",),
            vmem_limit_bytes=vmem_limit_bytes),
    )(scale2, shift2, y)

    # [M, Cout] -> NHWC -> NCHW (drop padding)
    out2d = out2d[:M, :Cout]
    return jnp.transpose(out2d.reshape(N, H, W, Cout), (0, 3, 1, 2))


def reference(x109, x102, gamma1, beta1, conv_w, gamma2, beta2,
              matmul_dtype=jnp.float32):
    """Pure-JAX reference mirroring the PyTorch training-mode forward."""
    def bn(x, g, b):
        mean = jnp.mean(x, axis=(0, 2, 3), keepdims=True)
        var = jnp.mean((x - mean) ** 2, axis=(0, 2, 3), keepdims=True)
        return ((x - mean) * lax.rsqrt(var + EPS) * g.reshape(1, -1, 1, 1)
                + b.reshape(1, -1, 1, 1))

    a = jnp.maximum(bn(x109, gamma1, beta1) + x102, 0.0)
    y = lax.conv_general_dilated(
        a.astype(matmul_dtype), conv_w.astype(matmul_dtype),
        window_strides=(1, 1), padding="VALID",
        dimension_numbers=("NCHW", "OIHW", "NCHW"),
        preferred_element_type=jnp.float32)
    return bn(y, gamma2, beta2)


if __name__ == "__main__":
    # Small but lane-dense shapes consistent with the module structure
    # (real module: N=1, Cin=1024, Cout=256, H=W=28).
    N, Cin, Cout, H, W = 2, 256, 128, 16, 16

    key = jax.random.PRNGKey(0)
    k1, k2, k3, k4, k5, k6, k7 = jax.random.split(key, 7)

    x109 = jax.random.normal(k1, (N, Cin, H, W), dtype=jnp.float32)
    x102 = jax.random.normal(k2, (N, Cin, H, W), dtype=jnp.float32)

    gamma1 = 1.0 + 0.1 * jax.random.normal(k3, (Cin,), dtype=jnp.float32)
    beta1 = 0.1 * jax.random.normal(k4, (Cin,), dtype=jnp.float32)
    conv_w = jax.random.normal(k5, (Cout, Cin, 1, 1), dtype=jnp.float32) / jnp.sqrt(Cin)
    gamma2 = 1.0 + 0.1 * jax.random.normal(k6, (Cout,), dtype=jnp.float32)
    beta2 = 0.1 * jax.random.normal(k7, (Cout,), dtype=jnp.float32)

    out = jax.jit(fused_module)(x109, x102, gamma1, beta1, conv_w, gamma2, beta2)
    out = jax.block_until_ready(out)
    assert out.shape == (N, Cout, H, W), out.shape

    # Tight check vs a reference whose conv also runs in bf16 (matches the
    # kernel's MXU precision); everything else is f32.
    ref_bf16 = reference(x109, x102, gamma1, beta1, conv_w, gamma2, beta2,
                         matmul_dtype=jnp.bfloat16)
    assert jnp.allclose(out, ref_bf16, atol=1e-2, rtol=1e-2), \
        float(jnp.max(jnp.abs(out - ref_bf16)))

    # Loose sanity check vs the pure-f32 PyTorch-style reference (bf16 matmul
    # introduces ~1e-2 scale deviations, largely absorbed by the trailing BN).
    ref_f32 = reference(x109, x102, gamma1, beta1, conv_w, gamma2, beta2)
    assert jnp.allclose(out, ref_f32, atol=1e-1, rtol=1e-1), \
        float(jnp.max(jnp.abs(out - ref_f32)))

    print("KERNEL_OK")
</pallas_src>

<mosaic_0001>
module attributes {stable_mosaic.version = 11 : i64} {
  func.func @_xstats_kernel(%arg0: i32, %arg1: memref<128x256xf32, #tpu.memory_space<vmem>>, %arg2: memref<2x256xf32, #tpu.memory_space<vmem>>) attributes {dimension_semantics = [#tpu.dimension_semantics<arbitrary>], iteration_bounds = array<i64: 4>, scalar_prefetch = 0 : i64, scratch_operands = 0 : i64, tpu.core_type = #tpu.core_type<tc>, window_params = [{transform_indices = @transform_0, window_bounds = array<i64: 128, 256>}, {pipeline_mode = #tpu.pipeline_mode<synchronous>, transform_indices = @transform_1, window_bounds = array<i64: 2, 256>}]} {
    %c0_i32 = arith.constant 0 : i32
    %0 = arith.cmpi eq, %arg0, %c0_i32 : i32
    %1 = arith.extui %0 : i1 to i32
    %c0_i32_0 = arith.constant 0 : i32
    %2 = arith.cmpi ne, %1, %c0_i32_0 : i32
    scf.if %2 {
      %cst_7 = arith.constant 0.000000e+00 : f32
      %13 = vector.broadcast %cst_7 : f32 to vector<2x256xf32>
      %c0_8 = arith.constant 0 : index
      %c0_9 = arith.constant 0 : index
      %14 = vector.load %arg2[%c0_8, %c0_9] : memref<2x256xf32, #tpu.memory_space<vmem>>, vector<2x256xf32>
      tpu.vector_store %arg2[%c0_8, %c0_9], %13 {strides = array<i32>} : memref<2x256xf32, #tpu.memory_space<vmem>>, vector<2x256xf32>,
    } else {
    }
    %c0 = arith.constant 0 : index
    %c0_1 = arith.constant 0 : index
    %3 = vector.load %arg1[%c0, %c0_1] : memref<128x256xf32, #tpu.memory_space<vmem>>, vector<128x256xf32>
    %cst = arith.constant dense<0.000000e+00> : vector<256xf32>
    %4 = vector.multi_reduction <add>, %3, %cst [0] : vector<128x256xf32> to vector<256xf32>
    %5 = vector.shape_cast %4 : vector<256xf32> to vector<1x256xf32>
    %6 = arith.mulf %3, %3 : vector<128x256xf32>
    %cst_2 = arith.constant dense<0.000000e+00> : vector<256xf32>
    %7 = vector.multi_reduction <add>, %6, %cst_2 [0] : vector<128x256xf32> to vector<256xf32>
    %8 = vector.shape_cast %7 : vector<256xf32> to vector<1x256xf32>
    %c0_3 = arith.constant 0 : index
    %c0_4 = arith.constant 0 : index
    %9 = vector.load %arg2[%c0_3, %c0_4] : memref<2x256xf32, #tpu.memory_space<vmem>>, vector<2x256xf32>
    %10 = tpu.concatenate %5, %8 in 0 : vector<1x256xf32>, vector<1x256xf32> -> vector<2x256xf32>
    %11 = arith.addf %9, %10 : vector<2x256xf32>
    %c0_5 = arith.constant 0 : index
    %c0_6 = arith.constant 0 : index
    %12 = vector.load %arg2[%c0_5, %c0_6] : memref<2x256xf32, #tpu.memory_space<vmem>>, vector<2x256xf32>
    tpu.vector_store %arg2[%c0_5, %c0_6], %11 {strides = array<i32>} : memref<2x256xf32, #tpu.memory_space<vmem>>, vector<2x256xf32>,
    return
  }
  func.func @transform_0(%arg0: i32) -> (i32, i32) {
    %c0_i32 = arith.constant 0 : i32
    %c0_i32_0 = arith.constant 0 : i32
    return %arg0, %c0_i32 : i32, i32
  }
  func.func @transform_1(%arg0: i32) -> (i32, i32) {
    %c0_i32 = arith.constant 0 : i32
    %c0_i32_0 = arith.constant 0 : i32
    %c0_i32_1 = arith.constant 0 : i32
    return %c0_i32, %c0_i32_0 : i32, i32
  }
}

module attributes {stable_mosaic.version = 11 : i64} {
  func.func @_affine_kernel(%arg0: i32, %arg1: memref<1x128xf32, #tpu.memory_space<vmem>>, %arg2: memref<1x128xf32, #tpu.memory_space<vmem>>, %arg3: memref<128x128xf32, #tpu.memory_space<vmem>>, %arg4: memref<128x128xf32, #tpu.memory_space<vmem>>) attributes {dimension_semantics = [#tpu.dimension_semantics<parallel>], iteration_bounds = array<i64: 4>, scalar_prefetch = 0 : i64, scratch_operands = 0 : i64, tpu.core_type = #tpu.core_type<tc>, window_params = [{pipeline_mode = #tpu.pipeline_mode<synchronous>, transform_indices = @transform_0, window_bounds = array<i64: 1, 128>}, {pipeline_mode = #tpu.pipeline_mode<synchronous>, transform_indices = @transform_1, window_bounds = array<i64: 1, 128>}, {transform_indices = @transform_2, window_bounds = array<i64: 128, 128>}, {transform_indices = @transform_3, window_bounds = array<i64: 128, 128>}]} {
    %c0 = arith.constant 0 : index
    %c0_0 = arith.constant 0 : index
    %0 = vector.load %arg3[%c0, %c0_0] : memref<128x128xf32, #tpu.memory_space<vmem>>, vector<128x128xf32>
    %c0_1 = arith.constant 0 : index
    %c0_2 = arith.constant 0 : index
    %1 = vector.load %arg1[%c0_1, %c0_2] : memref<1x128xf32, #tpu.memory_space<vmem>>, vector<1x128xf32>
    %2 = vector.broadcast %1 : vector<1x128xf32> to vector<128x128xf32>
    %3 = arith.mulf %0, %2 : vector<128x128xf32>
    %c0_3 = arith.constant 0 : index
    %c0_4 = arith.constant 0 : index
    %4 = vector.load %arg2[%c0_3, %c0_4] : memref<1x128xf32, #tpu.memory_space<vmem>>, vector<1x128xf32>
    %5 = vector.broadcast %4 : vector<1x128xf32> to vector<128x128xf32>
    %6 = arith.addf %3, %5 : vector<128x128xf32>
    %c0_5 = arith.constant 0 : index
    %c0_6 = arith.constant 0 : index
    %7 = vector.load %arg4[%c0_5, %c0_6] : memref<128x128xf32, #tpu.memory_space<vmem>>, vector<128x128xf32>
    tpu.vector_store %arg4[%c0_5, %c0_6], %6 {strides = array<i32>} : memref<128x128xf32, #tpu.memory_space<vmem>>, vector<128x128xf32>,
    return
  }
  func.func @transform_0(%arg0: i32) -> (i32, i32) {
    %c0_i32 = arith.constant 0 : i32
    %c0_i32_0 = arith.constant 0 : i32
    %c0_i32_1 = arith.constant 0 : i32
    return %c0_i32, %c0_i32_0 : i32, i32
  }
  func.func @transform_1(%arg0: i32) -> (i32, i32) {
    %c0_i32 = arith.constant 0 : i32
    %c0_i32_0 = arith.constant 0 : i32
    %c0_i32_1 = arith.constant 0 : i32
    return %c0_i32, %c0_i32_0 : i32, i32
  }
  func.func @transform_2(%arg0: i32) -> (i32, i32) {
    %c0_i32 = arith.constant 0 : i32
    %c0_i32_0 = arith.constant 0 : i32
    return %arg0, %c0_i32 : i32, i32
  }
  func.func @transform_3(%arg0: i32) -> (i32, i32) {
    %c0_i32 = arith.constant 0 : i32
    %c0_i32_0 = arith.constant 0 : i32
    return %arg0, %c0_i32 : i32, i32
  }
}

module attributes {stable_mosaic.version = 11 : i64} {
  func.func @_bn_add_relu_matmul_kernel(%arg0: i32, %arg1: memref<1x256xf32, #tpu.memory_space<vmem>>, %arg2: memref<1x256xf32, #tpu.memory_space<vmem>>, %arg3: memref<128x256xf32, #tpu.memory_space<vmem>>, %arg4: memref<128x256xf32, #tpu.memory_space<vmem>>, %arg5: memref<256x128xbf16, #tpu.memory_space<vmem>>, %arg6: memref<128x128xf32, #tpu.memory_space<vmem>>, %arg7: memref<2x128xf32, #tpu.memory_space<vmem>>) attributes {dimension_semantics = [#tpu.dimension_semantics<arbitrary>], iteration_bounds = array<i64: 4>, scalar_prefetch = 0 : i64, scratch_operands = 0 : i64, tpu.core_type = #tpu.core_type<tc>, window_params = [{pipeline_mode = #tpu.pipeline_mode<synchronous>, transform_indices = @transform_0, window_bounds = array<i64: 1, 256>}, {pipeline_mode = #tpu.pipeline_mode<synchronous>, transform_indices = @transform_1, window_bounds = array<i64: 1, 256>}, {transform_indices = @transform_2, window_bounds = array<i64: 128, 256>}, {transform_indices = @transform_3, window_bounds = array<i64: 128, 256>}, {pipeline_mode = #tpu.pipeline_mode<synchronous>, transform_indices = @transform_4, window_bounds = array<i64: 256, 128>}, {transform_indices = @transform_5, window_bounds = array<i64: 128, 128>}, {pipeline_mode = #tpu.pipeline_mode<synchronous>, transform_indices = @transform_6, window_bounds = array<i64: 2, 128>}]} {
    %c0_i32 = arith.constant 0 : i32
    %0 = arith.cmpi eq, %arg0, %c0_i32 : i32
    %1 = arith.extui %0 : i1 to i32
    %c0_i32_0 = arith.constant 0 : i32
    %2 = arith.cmpi ne, %1, %c0_i32_0 : i32
    scf.if %2 {
      %cst_19 = arith.constant 0.000000e+00 : f32
      %27 = vector.broadcast %cst_19 : f32 to vector<2x128xf32>
      %c0_20 = arith.constant 0 : index
      %c0_21 = arith.constant 0 : index
      %28 = vector.load %arg7[%c0_20, %c0_21] : memref<2x128xf32, #tpu.memory_space<vmem>>, vector<2x128xf32>
      tpu.vector_store %arg7[%c0_20, %c0_21], %27 {strides = array<i32>} : memref<2x128xf32, #tpu.memory_space<vmem>>, vector<2x128xf32>,
    } else {
    }
    %c0 = arith.constant 0 : index
    %c0_1 = arith.constant 0 : index
    %3 = vector.load %arg3[%c0, %c0_1] : memref<128x256xf32, #tpu.memory_space<vmem>>, vector<128x256xf32>
    %c0_2 = arith.constant 0 : index
    %c0_3 = arith.constant 0 : index
    %4 = vector.load %arg1[%c0_2, %c0_3] : memref<1x256xf32, #tpu.memory_space<vmem>>, vector<1x256xf32>
    %5 = vector.broadcast %4 : vector<1x256xf32> to vector<128x256xf32>
    %6 = arith.mulf %3, %5 : vector<128x256xf32>
    %c0_4 = arith.constant 0 : index
    %c0_5 = arith.constant 0 : index
    %7 = vector.load %arg2[%c0_4, %c0_5] : memref<1x256xf32, #tpu.memory_space<vmem>>, vector<1x256xf32>
    %8 = vector.broadcast %7 : vector<1x256xf32> to vector<128x256xf32>
    %9 = arith.addf %6, %8 : vector<128x256xf32>
    %c0_6 = arith.constant 0 : index
    %c0_7 = arith.constant 0 : index
    %10 = vector.load %arg4[%c0_6, %c0_7] : memref<128x256xf32, #tpu.memory_space<vmem>>, vector<128x256xf32>
    %11 = arith.addf %9, %10 : vector<128x256xf32>
    %cst = arith.constant 0.000000e+00 : f32
    %12 = vector.broadcast %cst : f32 to vector<128x256xf32>
    %13 = arith.maximumf %11, %12 : vector<128x256xf32>
    %14 = arith.truncf %13 : vector<128x256xf32> to vector<128x256xbf16>
    %c0_8 = arith.constant 0 : index
    %c0_9 = arith.constant 0 : index
    %15 = vector.load %arg5[%c0_8, %c0_9] : memref<256x128xbf16, #tpu.memory_space<vmem>>, vector<256x128xbf16>
    %cst_10 = arith.constant dense<0.000000e+00> : vector<128x128xf32>
    %16 = tpu.matmul %14, %15, %cst_10 {dimension_numbers = #tpu.dot_dimension_numbers<[1], [0], [0], [1], [0, 0, 1, 1], [], []>} : vector<128x256xbf16>, vector<256x128xbf16>, vector<128x128xf32> -> vector<128x128xf32>
    %c0_11 = arith.constant 0 : index
    %c0_12 = arith.constant 0 : index
    %17 = vector.load %arg6[%c0_11, %c0_12] : memref<128x128xf32, #tpu.memory_space<vmem>>, vector<128x128xf32>
    tpu.vector_store %arg6[%c0_11, %c0_12], %16 {strides = array<i32>} : memref<128x128xf32, #tpu.memory_space<vmem>>, vector<128x128xf32>,
    %cst_13 = arith.constant dense<0.000000e+00> : vector<128xf32>
    %18 = vector.multi_reduction <add>, %16, %cst_13 [0] : vector<128x128xf32> to vector<128xf32>
    %19 = vector.shape_cast %18 : vector<128xf32> to vector<1x128xf32>
    %20 = arith.mulf %16, %16 : vector<128x128xf32>
    %cst_14 = arith.constant dense<0.000000e+00> : vector<128xf32>
    %21 = vector.multi_reduction <add>, %20, %cst_14 [0] : vector<128x128xf32> to vector<128xf32>
    %22 = vector.shape_cast %21 : vector<128xf32> to vector<1x128xf32>
    %c0_15 = arith.constant 0 : index
    %c0_16 = arith.constant 0 : index
    %23 = vector.load %arg7[%c0_15, %c0_16] : memref<2x128xf32, #tpu.memory_space<vmem>>, vector<2x128xf32>
    %24 = tpu.concatenate %19, %22 in 0 : vector<1x128xf32>, vector<1x128xf32> -> vector<2x128xf32>
    %25 = arith.addf %23, %24 : vector<2x128xf32>
    %c0_17 = arith.constant 0 : index
    %c0_18 = arith.constant 0 : index
    %26 = vector.load %arg7[%c0_17, %c0_18] : memref<2x128xf32, #tpu.memory_space<vmem>>, vector<2x128xf32>
    tpu.vector_store %arg7[%c0_17, %c0_18], %25 {strides = array<i32>} : memref<2x128xf32, #tpu.memory_space<vmem>>, vector<2x128xf32>,
    return
  }
  func.func @transform_0(%arg0: i32) -> (i32, i32) {
    %c0_i32 = arith.constant 0 : i32
    %c0_i32_0 = arith.constant 0 : i32
    %c0_i32_1 = arith.constant 0 : i32
    return %c0_i32, %c0_i32_0 : i32, i32
  }
  func.func @transform_1(%arg0: i32) -> (i32, i32) {
    %c0_i32 = arith.constant 0 : i32
    %c0_i32_0 = arith.constant 0 : i32
    %c0_i32_1 = arith.constant 0 : i32
    return %c0_i32, %c0_i32_0 : i32, i32
  }
  func.func @transform_2(%arg0: i32) -> (i32, i32) {
    %c0_i32 = arith.constant 0 : i32
    %c0_i32_0 = arith.constant 0 : i32
    return %arg0, %c0_i32 : i32, i32
  }
  func.func @transform_3(%arg0: i32) -> (i32, i32) {
    %c0_i32 = arith.constant 0 : i32
    %c0_i32_0 = arith.constant 0 : i32
    return %arg0, %c0_i32 : i32, i32
  }
  func.func @transform_4(%arg0: i32) -> (i32, i32) {
    %c0_i32 = arith.constant 0 : i32
    %c0_i32_0 = arith.constant 0 : i32
    %c0_i32_1 = arith.constant 0 : i32
    return %c0_i32, %c0_i32_0 : i32, i32
  }
  func.func @transform_5(%arg0: i32) -> (i32, i32) {
    %c0_i32 = arith.constant 0 : i32
    %c0_i32_0 = arith.constant 0 : i32
    return %arg0, %c0_i32 : i32, i32
  }
  func.func @transform_6(%arg0: i32) -> (i32, i32) {
    %c0_i32 = arith.constant 0 : i32
    %c0_i32_0 = arith.constant 0 : i32
    %c0_i32_1 = arith.constant 0 : i32
    return %c0_i32, %c0_i32_0 : i32, i32
  }
}

</mosaic_0001>

<llo_original>
// kernel: fused_module.3
$region0: #{fused_module.3}
  #allocation0 [shape = 'u32[]', space=smem, size = 0x4, offset = 0x4, fixed_abs, tag = 'smem constant byte address 0x4 - core index']
  #allocation1 [shape = 'u32[72,128]{1,0:T(1,128)}', space=vmem, size = 0x9000, scoped, tag = 'internal scratch']
  %s0 = inlined_call_operand.hbm [shape: f32[512,256], index: 0, kind: input, shape index: {}]
  %s1 = inlined_call_operand.vmem [shape: f32[2,256], index: 1, kind: output, shape index: {}]
  %s2 = sld [smem:[#allocation0]]
  $region45: #{fused_module.3} parent=0
    _
  %s4 = ssub.s32 1, %s2
  %s5 = scalar_select 0, %s4, %s2
  $region1: #{fused_module.3} parent=0
    #allocation2 [shape = 'u8[262144]{0}', space=vmem, size = 0x40000, scoped, tag = 'input window, operand 0']
    #allocation3 [shape = 's32[2]{0}', space=sflag, size = 0x8, scoped, tag = 'scoped memory for fused_module.3']
    %6 = vsyncpa [#allocation3], 0
    %s7 = scalar_lea.sflag [#allocation3], 1
    %8 = vsyncpa %s7, 0
    loop: start=0, step=1, limit=6
    $region2: #{fused_module.3} parent=1 // loop_pre_header
      _
    $region3: #{fused_module.3} parent=1 // loop_header
      %s10 = sphi 0, %s14
      %p11 = scmp.ge.s32.totalorder %s10, 6
      %s20 = sphi 0, %s22
      %s23 = sphi 0, %s20
      %s24 = sphi 0, %s23
      %s40 = sphi 0, %s24
      %s44 = sphi 0, %s44
      %s46 = sphi 0, %s44
      %s47 = sphi 0, %s46
      %s61 = sphi 0, %s47
    $region4: #{fused_module.3} parent=1 // loop_header_branch
      %13 = sbr.rel (%p11) target = $region8
    $region5: #{fused_module.3} parent=1 // loop_body
      %s15 = ssub.s32 %s10, 1
      %s16 = ssub.s32 %s10, 2
      %s17 = sadd.s32 %s10, 1
      %s18 = ssub.s32 %s10, %s17
      %p19 = scmp.eq.s32.totalorder %s18, 0
      %s21 = sadd.s32 %s20, 1
      %s22 = scalar_select %p19, %s20, %s21
      %p25 = pneg %p19
      %p26 = scmp.eq.s32.totalorder %s10, 3
      %p27 = por %p25, %p26
      %p28 = scmp.ne.s32.totalorder %s20, %s23
      %p29 = scmp.eq.s32.totalorder %s10, 0
      %p30 = por %p28, %p29
      %p31 = scmp.ne.s32.totalorder %s20, %s23
      %p32 = scmp.eq.s32.totalorder %s15, 3
      %p33 = por %p31, %p32
      %p34 = scmp.ne.s32.totalorder %s23, %s24
      %p35 = scmp.eq.s32.totalorder %s15, 0
      %p36 = por %p34, %p35
      %p37 = scmp.ne.s32.totalorder %s23, %s24
      %p38 = scmp.eq.s32.totalorder %s16, 3
      %p39 = por %p37, %p38
      %p41 = scmp.ne.s32.totalorder %s24, %s40
      %p42 = scmp.eq.s32.totalorder %s16, 0
      %p43 = por %p41, %p42
      %s45 = sadd.s32 %s44, 1
      %p48 = scmp.eq.s32.totalorder %s10, 3
      %p49 = scmp.ne.s32.totalorder %s44, %s46
      %p50 = scmp.eq.s32.totalorder %s10, 0
      %p51 = por %p49, %p50
      %p52 = scmp.ne.s32.totalorder %s44, %s46
      %p53 = scmp.eq.s32.totalorder %s15, 3
      %p54 = por %p52, %p53
      %p55 = scmp.ne.s32.totalorder %s46, %s47
      %p56 = scmp.eq.s32.totalorder %s15, 0
      %p57 = por %p55, %p56
      %p58 = scmp.ne.s32.totalorder %s46, %s47
      %p59 = scmp.eq.s32.totalorder %s16, 3
      %p60 = por %p58, %p59
      %p62 = scmp.ne.s32.totalorder %s47, %s61
      %p63 = scmp.eq.s32.totalorder %s16, 0
      %p64 = por %p62, %p63
      %p65 = scmp.le.s32.totalorder 1, %s10
      %p66 = scmp.lt.s32.totalorder %s10, 5
      %p67 = pnand %p65, %p66
      %p68 = pneg %p67
      // Predicated region
      $region9: #{fused_module.3} parent=5 // pred_check
        _
      $region10: #{fused_module.3} parent=5 // pred_check_branch
        %70 = sbr.rel (%p67) target = $region12
      $region11: #{fused_module.3} parent=5 // pred_region
        %s71 = ssub.s32 %s10, 1
      $region12: #{fused_module.3} parent=5 // pred_fallthru
        _
      %p72 = scmp.lt.s32.totalorder %s10, 4
      // Predicated region
      $region13: #{fused_module.3} parent=5 // pred_check
        %p73 = pneg %p72
      $region14: #{fused_module.3} parent=5 // pred_check_branch
        %75 = sbr.rel (%p73) target = $region16
      $region15: #{fused_module.3} parent=5 // pred_region
        // Predicated region
        $region17: #{fused_module.3} parent=15 // pred_check
          %p76 = pneg %p30
        $region18: #{fused_module.3} parent=15 // pred_check_branch
          %78 = sbr.rel (%p76) target = $region20
        $region19: #{fused_module.3} parent=15 // pred_region
          %s79 = sand.u32 %s20, 1
          %s80 = scalar_lea.sflag [#allocation3], %s79
          %s81 = sand.u32 %s20, 1
          %s82 = smul.addr %s81, 256
          %s83 = scalar_lea.vmem [#allocation2], %s82
          %s84 = smul.u32 16, %s10
          %86 = vsyncadd %s80, 0
          %s87 = smul.addr %s84, 2
          %s88 = smul.addr %s87, 8
          %s89 = scalar_lea.hbm %s0, %s88
          %s90 = sshll.u32 %s89, 4
          %s91 = int_to_ptr.hbm [resolvable:$true] %s90
          %s92 = sshll.u32 %s83, 4
          %s93 = int_to_ptr.vmem [resolvable:$true] %s92
          %98 = dma.hbm_to_vmem [thread:$0]  %s91, 4096, %s93, %s80, 256, 256, 16
        $region20: #{fused_module.3} parent=15 // pred_fallthru
          _
      $region16: #{fused_module.3} parent=5 // pred_fallthru
        _
      %p99 = scmp.le.s32.totalorder 1, %s10
      %p100 = scmp.lt.s32.totalorder %s10, 5
      %p101 = pnand %p99, %p100
      %p102 = pneg %p101
      // Predicated region
      $region21: #{fused_module.3} parent=5 // pred_check
        _
      $region22: #{fused_module.3} parent=5 // pred_check_branch
        %104 = sbr.rel (%p101) target = $region24
      $region23: #{fused_module.3} parent=5 // pred_region
        %s105 = ssub.s32 %s10, 1
        %s106 = sand.u32 %s23, 1
        %s107 = scalar_lea.sflag [#allocation3], %s106
        %s108 = sand.u32 %s23, 1
        %s109 = smul.addr %s108, 256
        %s110 = scalar_lea.vmem [#allocation2], %s109
        // Predicated region
        $region25: #{fused_module.3} parent=23 // pred_check
          %p111 = pneg %p36
        $region26: #{fused_module.3} parent=23 // pred_check_branch
          %113 = sbr.rel (%p111) target = $region28
        $region27: #{fused_module.3} parent=23 // pred_region
          %115 = dma.done %s107, 4096
        $region28: #{fused_module.3} parent=23 // pred_fallthru
          _
        %s116 = sand.u32 %s23, 1
        %s117 = scalar_lea.sflag [#allocation3], %s116
        %s118 = sand.u32 %s23, 1
        %s119 = smul.addr %s118, 256
        %s120 = scalar_lea.vmem [#allocation2], %s119
        %p121 = pneg %p36
        %p122 = pneg %p33
        %p123 = pneg %p57
        %p124 = pneg %p54
        %s125 = smul.u32 16, %s15
        %p126 = scmp.eq.s32.totalorder %s15, 0
        // Predicated region
        $region29: #{fused_module.3} parent=23 // pred_check
          %p127 = pneg %p126
        $region30: #{fused_module.3} parent=23 // pred_check_branch
          %129 = sbr.rel (%p127) target = $region32
        $region31: #{fused_module.3} parent=23 // pred_region
          %130 = vst [vmem:[%s1] sm:$0xf] 0.0
        $region32: #{fused_module.3} parent=23 // pred_fallthru
          _
        %v131 = vld [vmem:[%s110] sm:$0xff]
        %v132 = vld [vmem:[%s110 + $0x8] sm:$0xff]
        %v133 = vld [vmem:[%s110 + $0x10] sm:$0xff]
        %v134 = vld [vmem:[%s110 + $0x18] sm:$0xff]
        %v135 = vld [vmem:[%s110 + $0x20] sm:$0xff]
        %v136 = vld [vmem:[%s110 + $0x28] sm:$0xff]
        %v137 = vld [vmem:[%s110 + $0x30] sm:$0xff]
        %v138 = vld [vmem:[%s110 + $0x38] sm:$0xff]
        %v139 = vld [vmem:[%s110 + $0x40] sm:$0xff]
        %v140 = vld [vmem:[%s110 + $0x48] sm:$0xff]
        %v141 = vld [vmem:[%s110 + $0x50] sm:$0xff]
        %v142 = vld [vmem:[%s110 + $0x58] sm:$0xff]
        %v143 = vld [vmem:[%s110 + $0x60] sm:$0xff]
        %v144 = vld [vmem:[%s110 + $0x68] sm:$0xff]
        %v145 = vld [vmem:[%s110 + $0x70] sm:$0xff]
        %v146 = vld [vmem:[%s110 + $0x78] sm:$0xff]
        %v147 = vld [vmem:[%s110 + $0x80] sm:$0xff]
        %v148 = vld [vmem:[%s110 + $0x88] sm:$0xff]
        %v149 = vld [vmem:[%s110 + $0x90] sm:$0xff]
        %v150 = vld [vmem:[%s110 + $0x98] sm:$0xff]
        %v151 = vld [vmem:[%s110 + $0xa0] sm:$0xff]
        %v152 = vld [vmem:[%s110 + $0xa8] sm:$0xff]
        %v153 = vld [vmem:[%s110 + $0xb0] sm:$0xff]
        %v154 = vld [vmem:[%s110 + $0xb8] sm:$0xff]
        %v155 = vld [vmem:[%s110 + $0xc0] sm:$0xff]
        %v156 = vld [vmem:[%s110 + $0xc8] sm:$0xff]
        %v157 = vld [vmem:[%s110 + $0xd0] sm:$0xff]
        %v158 = vld [vmem:[%s110 + $0xd8] sm:$0xff]
        %v159 = vld [vmem:[%s110 + $0xe0] sm:$0xff]
        %v160 = vld [vmem:[%s110 + $0xe8] sm:$0xff]
        %v161 = vld [vmem:[%s110 + $0xf0] sm:$0xff]
        %v162 = vld [vmem:[%s110 + $0xf8] sm:$0xff]
        %v163 = vadd.f32 %v131, %v133
        %v164 = vadd.f32 %v163, %v135
        %v165 = vadd.f32 %v164, %v137
        %v166 = vadd.f32 %v165, %v139
        %v167 = vadd.f32 %v166, %v141
        %v168 = vadd.f32 %v167, %v143
        %v169 = vadd.f32 %v168, %v145
        %v170 = vadd.f32 %v169, %v147
        %v171 = vadd.f32 %v170, %v149
        %v172 = vadd.f32 %v171, %v151
        %v173 = vadd.f32 %v172, %v153
        %v174 = vadd.f32 %v173, %v155
        %v175 = vadd.f32 %v174, %v157
        %v176 = vadd.f32 %v175, %v159
        %v177 = vadd.f32 %v176, %v161
        %v178 = vrot.slane %v177, 4
        %v179 = vadd.f32 %v177, %v178
        %v180 = vrot.slane %v179, 2
        %v181 = vadd.f32 %v179, %v180
        %v182 = vrot.slane %v181, 1
        %v183 = vadd.f32 %v181, %v182
        %v184 = vadd.f32 %v132, %v134
        %v185 = vadd.f32 %v184, %v136
        %v186 = vadd.f32 %v185, %v138
        %v187 = vadd.f32 %v186, %v140
        %v188 = vadd.f32 %v187, %v142
        %v189 = vadd.f32 %v188, %v144
        %v190 = vadd.f32 %v189, %v146
        %v191 = vadd.f32 %v190, %v148
        %v192 = vadd.f32 %v191, %v150
        %v193 = vadd.f32 %v192, %v152
        %v194 = vadd.f32 %v193, %v154
        %v195 = vadd.f32 %v194, %v156
        %v196 = vadd.f32 %v195, %v158
        %v197 = vadd.f32 %v196, %v160
        %v198 = vadd.f32 %v197, %v162
        %v199 = vrot.slane %v198, 4
        %v200 = vadd.f32 %v198, %v199
        %v201 = vrot.slane %v200, 2
        %v202 = vadd.f32 %v200, %v201
        %v203 = vrot.slane %v202, 1
        %v204 = vadd.f32 %v202, %v203
        %v205 = vmul.f32 %v131, %v131
        %v206 = vmul.f32 %v132, %v132
        %v207 = vmul.f32 %v133, %v133
        %v208 = vmul.f32 %v134, %v134
        %v209 = vmul.f32 %v135, %v135
        %v210 = vmul.f32 %v136, %v136
        %v211 = vmul.f32 %v137, %v137
        %v212 = vmul.f32 %v138, %v138
        %v213 = vmul.f32 %v139, %v139
        %v214 = vmul.f32 %v140, %v140
        %v215 = vmul.f32 %v141, %v141
        %v216 = vmul.f32 %v142, %v142
        %v217 = vmul.f32 %v143, %v143
        %v218 = vmul.f32 %v144, %v144
        %v219 = vmul.f32 %v145, %v145
        %v220 = vmul.f32 %v146, %v146
        %v221 = vmul.f32 %v147, %v147
        %v222 = vmul.f32 %v148, %v148
        %v223 = vmul.f32 %v149, %v149
        %v224 = vmul.f32 %v150, %v150
        %v225 = vmul.f32 %v151, %v151
        %v226 = vmul.f32 %v152, %v152
        %v227 = vmul.f32 %v153, %v153
        %v228 = vmul.f32 %v154, %v154
        %v229 = vmul.f32 %v155, %v155
        %v230 = vmul.f32 %v156, %v156
        %v231 = vmul.f32 %v157, %v157
        %v232 = vmul.f32 %v158, %v158
        %v233 = vmul.f32 %v159, %v159
        %v234 = vmul.f32 %v160, %v160
        %v235 = vmul.f32 %v161, %v161
        %v236 = vmul.f32 %v162, %v162
        %v237 = vadd.f32 %v205, %v207
        %v238 = vadd.f32 %v237, %v209
        %v239 = vadd.f32 %v238, %v211
        %v240 = vadd.f32 %v239, %v213
        %v241 = vadd.f32 %v240, %v215
        %v242 = vadd.f32 %v241, %v217
        %v243 = vadd.f32 %v242, %v219
        %v244 = vadd.f32 %v243, %v221
        %v245 = vadd.f32 %v244, %v223
        %v246 = vadd.f32 %v245, %v225
        %v247 = vadd.f32 %v246, %v227
        %v248 = vadd.f32 %v247, %v229
        %v249 = vadd.f32 %v248, %v231
        %v250 = vadd.f32 %v249, %v233
        %v251 = vadd.f32 %v250, %v235
        %v252 = vrot.slane %v251, 4
        %v253 = vadd.f32 %v251, %v252
        %v254 = vrot.slane %v253, 2
        %v255 = vadd.f32 %v253, %v254
        %v256 = vrot.slane %v255, 1
        %v257 = vadd.f32 %v255, %v256
        %v258 = vadd.f32 %v206, %v208
        %v259 = vadd.f32 %v258, %v210
        %v260 = vadd.f32 %v259, %v212
        %v261 = vadd.f32 %v260, %v214
        %v262 = vadd.f32 %v261, %v216
        %v263 = vadd.f32 %v262, %v218
        %v264 = vadd.f32 %v263, %v220
        %v265 = vadd.f32 %v264, %v222
        %v266 = vadd.f32 %v265, %v224
        %v267 = vadd.f32 %v266, %v226
        %v268 = vadd.f32 %v267, %v228
        %v269 = vadd.f32 %v268, %v230
        %v270 = vadd.f32 %v269, %v232
        %v271 = vadd.f32 %v270, %v234
        %v272 = vadd.f32 %v271, %v236
        %v273 = vrot.slane %v272, 4
        %v274 = vadd.f32 %v272, %v273
        %v275 = vrot.slane %v274, 2
        %v276 = vadd.f32 %v274, %v275
        %v277 = vrot.slane %v276, 1
        %v278 = vadd.f32 %v276, %v277
        %v279 = vld [vmem:[%s1] sm:$0xf]
        %vm280 = vcmask 1040384
        %v281 = vsel %vm280, %v183, %v257
        %v282 = vsel %vm280, %v204, %v278
        %v285 = vrot.slane %v282, 6
        %vm286 = vcmask 1041408
        %v287 = vsel %vm286, %v281, %v285
        %v289 = vadd.f32 %v279, %v287
        %290 = vst [vmem:[%s1] sm:$0xf] %v289
        // Predicated region
        $region33: #{fused_module.3} parent=23 // pred_check
          %p291 = pneg %p54
        $region34: #{fused_module.3} parent=23 // pred_check_branch
          %293 = sbr.rel (%p291) target = $region36
        $region35: #{fused_module.3} parent=23 // pred_region
          _
        $region36: #{fused_module.3} parent=23 // pred_fallthru
          _
        // Predicated region
        $region37: #{fused_module.3} parent=23 // pred_check
          %p294 = pneg %p54
        $region38: #{fused_module.3} parent=23 // pred_check_branch
          %296 = sbr.rel (%p294) target = $region40
        $region39: #{fused_module.3} parent=23 // pred_region
          _
        $region40: #{fused_module.3} parent=23 // pred_fallthru
          _
      $region24: #{fused_module.3} parent=5 // pred_fallthru
        _
      %p297 = scmp.le.s32.totalorder 2, %s10
      // Predicated region
      $region41: #{fused_module.3} parent=5 // pred_check
        %p298 = pneg %p297
      $region42: #{fused_module.3} parent=5 // pred_check_branch
        %300 = sbr.rel (%p298) target = $region44
      $region43: #{fused_module.3} parent=5 // pred_region
        %s301 = ssub.s32 %s10, 2
      $region44: #{fused_module.3} parent=5 // pred_fallthru
        _
    $region6: #{fused_module.3} parent=1 // loop_footer
      %s14 = sadd.s32 1, %s10
    $region7: #{fused_module.3} parent=1 // loop_footer_branch
      %9 = sbr.rel target = $region3
    $region8: #{fused_module.3} parent=1 // loop_exit
      _
    %302 = vsyncpa [#allocation3], 1
    %s303 = scalar_lea.sflag [#allocation3], 1
    %304 = vsyncpa %s303, 1

// kernel: fused_module.5
$region0: #{fused_module.5}
  #allocation0 [shape = 'u32[]', space=smem, size = 0x4, offset = 0x4, fixed_abs, tag = 'smem constant byte address 0x4 - core index']
  #allocation1 [shape = 'u32[72,128]{1,0:T(1,128)}', space=vmem, size = 0x9000, scoped, tag = 'internal scratch']
  %s0 = inlined_call_operand.vmem [shape: f32[1,128], index: 0, kind: input, shape index: {}]
  %s1 = inlined_call_operand.vmem [shape: f32[1,128], index: 1, kind: input, shape index: {}]
  %s2 = inlined_call_operand.vmem [shape: f32[512,128], index: 2, kind: input, shape index: {}]
  %s3 = inlined_call_operand.hbm [shape: f32[512,128], index: 3, kind: output, shape index: {}]
  %s4 = sld [smem:[#allocation0]]
  $region45: #{fused_module.5} parent=0
    _
  %s6 = ssub.s32 1, %s4
  %s7 = scalar_select 0, %s6, %s4
  $region1: #{fused_module.5} parent=0
    #allocation2 [shape = 'u8[131072]{0}', space=vmem, size = 0x20000, scoped, tag = 'output window, operand 0']
    #allocation3 [shape = 's32[2]{0}', space=sflag, size = 0x8, scoped, tag = 'scoped memory for fused_module.5']
    %8 = vsyncpa [#allocation3], 0
    %s9 = scalar_lea.sflag [#allocation3], 1
    %10 = vsyncpa %s9, 0
    loop: start=0, step=1, limit=6
    $region2: #{fused_module.5} parent=1 // loop_pre_header
      _
    $region3: #{fused_module.5} parent=1 // loop_header
      %s12 = sphi 0, %s16
      %p13 = scmp.ge.s32.totalorder %s12, 6
      %s20 = sphi 0, %s20
      %s22 = sphi 0, %s20
      %s23 = sphi 0, %s22
      %s37 = sphi 0, %s23
      %s41 = sphi 0, %s41
      %s43 = sphi 0, %s41
      %s44 = sphi 0, %s43
      %s58 = sphi 0, %s44
      %s64 = sphi 0, %s66
      %s67 = sphi 0, %s64
      %s68 = sphi 0, %s67
      %s84 = sphi 0, %s68
      %s90 = sphi 0, %s92
      %s93 = sphi 0, %s90
      %s94 = sphi 0, %s93
      %s110 = sphi 0, %s94
    $region4: #{fused_module.5} parent=1 // loop_header_branch
      %15 = sbr.rel (%p13) target = $region8
    $region5: #{fused_module.5} parent=1 // loop_body
      %s17 = ssub.s32 %s12, 1
      %s18 = ssub.s32 %s12, 2
      %s19 = sadd.s32 %s12, 1
      %s21 = sadd.s32 %s20, 1
      %p24 = scmp.eq.s32.totalorder %s12, 3
      %p25 = scmp.ne.s32.totalorder %s20, %s22
      %p26 = scmp.eq.s32.totalorder %s12, 0
      %p27 = por %p25, %p26
      %p28 = scmp.ne.s32.totalorder %s20, %s22
      %p29 = scmp.eq.s32.totalorder %s17, 3
      %p30 = por %p28, %p29
      %p31 = scmp.ne.s32.totalorder %s22, %s23
      %p32 = scmp.eq.s32.totalorder %s17, 0
      %p33 = por %p31, %p32
      %p34 = scmp.ne.s32.totalorder %s22, %s23
      %p35 = scmp.eq.s32.totalorder %s18, 3
      %p36 = por %p34, %p35
      %p38 = scmp.ne.s32.totalorder %s23, %s37
      %p39 = scmp.eq.s32.totalorder %s18, 0
      %p40 = por %p38, %p39
      %s42 = sadd.s32 %s41, 1
      %p45 = scmp.eq.s32.totalorder %s12, 3
      %p46 = scmp.ne.s32.totalorder %s41, %s43
      %p47 = scmp.eq.s32.totalorder %s12, 0
      %p48 = por %p46, %p47
      %p49 = scmp.ne.s32.totalorder %s41, %s43
      %p50 = scmp.eq.s32.totalorder %s17, 3
      %p51 = por %p49, %p50
      %p52 = scmp.ne.s32.totalorder %s43, %s44
      %p53 = scmp.eq.s32.totalorder %s17, 0
      %p54 = por %p52, %p53
      %p55 = scmp.ne.s32.totalorder %s43, %s44
      %p56 = scmp.eq.s32.totalorder %s18, 3
      %p57 = por %p55, %p56
      %p59 = scmp.ne.s32.totalorder %s44, %s58
      %p60 = scmp.eq.s32.totalorder %s18, 0
      %p61 = por %p59, %p60
      %s62 = ssub.s32 %s12, %s19
      %p63 = scmp.eq.s32.totalorder %s62, 0
      %s65 = sadd.s32 %s64, 1
      %s66 = scalar_select %p63, %s64, %s65
      %p69 = pneg %p63
      %p70 = scmp.eq.s32.totalorder %s12, 3
      %p71 = por %p69, %p70
      %p72 = scmp.ne.s32.totalorder %s64, %s67
      %p73 = scmp.eq.s32.totalorder %s12, 0
      %p74 = por %p72, %p73
      %p75 = scmp.ne.s32.totalorder %s64, %s67
      %p76 = scmp.eq.s32.totalorder %s17, 3
      %p77 = por %p75, %p76
      %p78 = scmp.ne.s32.totalorder %s67, %s68
      %p79 = scmp.eq.s32.totalorder %s17, 0
      %p80 = por %p78, %p79
      %p81 = scmp.ne.s32.totalorder %s67, %s68
      %p82 = scmp.eq.s32.totalorder %s18, 3
      %p83 = por %p81, %p82
      %p85 = scmp.ne.s32.totalorder %s68, %s84
      %p86 = scmp.eq.s32.totalorder %s18, 0
      %p87 = por %p85, %p86
      %s88 = ssub.s32 %s12, %s19
      %p89 = scmp.eq.s32.totalorder %s88, 0
      %s91 = sadd.s32 %s90, 1
      %s92 = scalar_select %p89, %s90, %s91
      %p95 = pneg %p89
      %p96 = scmp.eq.s32.totalorder %s12, 3
      %p97 = por %p95, %p96
      %p98 = scmp.ne.s32.totalorder %s90, %s93
      %p99 = scmp.eq.s32.totalorder %s12, 0
      %p100 = por %p98, %p99
      %p101 = scmp.ne.s32.totalorder %s90, %s93
      %p102 = scmp.eq.s32.totalorder %s17, 3
      %p103 = por %p101, %p102
      %p104 = scmp.ne.s32.totalorder %s93, %s94
      %p105 = scmp.eq.s32.totalorder %s17, 0
      %p106 = por %p104, %p105
      %p107 = scmp.ne.s32.totalorder %s93, %s94
      %p108 = scmp.eq.s32.totalorder %s18, 3
      %p109 = por %p107, %p108
      %p111 = scmp.ne.s32.totalorder %s94, %s110
      %p112 = scmp.eq.s32.totalorder %s18, 0
      %p113 = por %p111, %p112
      %p114 = scmp.le.s32.totalorder 1, %s12
      %p115 = scmp.lt.s32.totalorder %s12, 5
      %p116 = pnand %p114, %p115
      %p117 = pneg %p116
      // Predicated region
      $region9: #{fused_module.5} parent=5 // pred_check
        _
      $region10: #{fused_module.5} parent=5 // pred_check_branch
        %119 = sbr.rel (%p116) target = $region12
      $region11: #{fused_module.5} parent=5 // pred_region
        %s120 = ssub.s32 %s12, 1
        // Predicated region
        $region13: #{fused_module.5} parent=11 // pred_check
          %p121 = pneg %p33
        $region14: #{fused_module.5} parent=11 // pred_check_branch
          %123 = sbr.rel (%p121) target = $region16
        $region15: #{fused_module.5} parent=11 // pred_region
          _
        $region16: #{fused_module.5} parent=11 // pred_fallthru
          _
        // Predicated region
        $region17: #{fused_module.5} parent=11 // pred_check
          %p124 = pneg %p54
        $region18: #{fused_module.5} parent=11 // pred_check_branch
          %126 = sbr.rel (%p124) target = $region20
        $region19: #{fused_module.5} parent=11 // pred_region
          _
        $region20: #{fused_module.5} parent=11 // pred_fallthru
          _
      $region12: #{fused_module.5} parent=5 // pred_fallthru
        _
      %p127 = scmp.lt.s32.totalorder %s12, 4
      // Predicated region
      $region21: #{fused_module.5} parent=5 // pred_check
        %p128 = pneg %p127
      $region22: #{fused_module.5} parent=5 // pred_check_branch
        %130 = sbr.rel (%p128) target = $region24
      $region23: #{fused_module.5} parent=5 // pred_region
        // Predicated region
        $region25: #{fused_module.5} parent=23 // pred_check
          %p131 = pneg %p74
        $region26: #{fused_module.5} parent=23 // pred_check_branch
          %133 = sbr.rel (%p131) target = $region28
        $region27: #{fused_module.5} parent=23 // pred_region
          %s134 = smul.u32 16, %s12
          %p135 = scmp.lt.s32.totalorder %s134, 63
          %s136 = scalar_select %p135, %s134, 63
          %s137 = smul.addr %s136, 8
          %s138 = scalar_lea.vmem %s2, %s137
          %s139 = smul.u32 16, %s12
        $region28: #{fused_module.5} parent=23 // pred_fallthru
          _
      $region24: #{fused_module.5} parent=5 // pred_fallthru
        _
      %p140 = scmp.le.s32.totalorder 1, %s12
      %p141 = scmp.lt.s32.totalorder %s12, 5
      %p142 = pnand %p140, %p141
      %p143 = pneg %p142
      // Predicated region
      $region29: #{fused_module.5} parent=5 // pred_check
        _
      $region30: #{fused_module.5} parent=5 // pred_check_branch
        %145 = sbr.rel (%p142) target = $region32
      $region31: #{fused_module.5} parent=5 // pred_region
        %s146 = ssub.s32 %s12, 1
        %p147 = pneg %p33
        %p148 = pneg %p30
        %p149 = pneg %p54
        %p150 = pneg %p51
        %s151 = smul.u32 16, %s17
        %p152 = scmp.lt.s32.totalorder %s151, 63
        %s153 = scalar_select %p152, %s151, 63
        %s154 = smul.addr %s153, 8
        %s155 = scalar_lea.vmem %s2, %s154
        %p156 = pneg %p80
        %p157 = pneg %p77
        %p158 = pneg %p106
        %p159 = pneg %p103
        %s160 = sand.u32 %s93, 1
        %s161 = scalar_lea.sflag [#allocation3], %s160
        %s162 = sand.u32 %s93, 1
        %s163 = smul.addr %s162, 128
        %s164 = scalar_lea.vmem [#allocation2], %s163
        %s165 = smul.u32 16, %s17
        %p166 = scmp.lt.s32.totalorder %s165, 63
        %s167 = scalar_select %p166, %s165, 63
        %s168 = smul.addr %s167, 8
        %s169 = scalar_lea.vmem %s2, %s168
        %s170 = smul.u32 16, %s17
        %s171 = smul.u32 16, %s17
        %v172 = vld [vmem:[%s169] sm:$0xff]
        %v173 = vld [vmem:[%s169 + $0x8] sm:$0xff]
        %v174 = vld [vmem:[%s169 + $0x10] sm:$0xff]
        %v175 = vld [vmem:[%s169 + $0x18] sm:$0xff]
        %v176 = vld [vmem:[%s169 + $0x20] sm:$0xff]
        %v177 = vld [vmem:[%s169 + $0x28] sm:$0xff]
        %v178 = vld [vmem:[%s169 + $0x30] sm:$0xff]
        %v179 = vld [vmem:[%s169 + $0x38] sm:$0xff]
        %v180 = vld [vmem:[%s169 + $0x40] sm:$0xff]
        %v181 = vld [vmem:[%s169 + $0x48] sm:$0xff]
        %v182 = vld [vmem:[%s169 + $0x50] sm:$0xff]
        %v183 = vld [vmem:[%s169 + $0x58] sm:$0xff]
        %v184 = vld [vmem:[%s169 + $0x60] sm:$0xff]
        %v185 = vld [vmem:[%s169 + $0x68] sm:$0xff]
        %v186 = vld [vmem:[%s169 + $0x70] sm:$0xff]
        %v187 = vld [vmem:[%s169 + $0x78] sm:$0xff]
        %v188 = vld [vmem:[%s0] sm:$0x1]
        %v190 = vperm.slane %v188, 0
        %v192 = vmul.f32 %v172, %v190
        %v193 = vmul.f32 %v173, %v190
        %v194 = vmul.f32 %v174, %v190
        %v195 = vmul.f32 %v175, %v190
        %v196 = vmul.f32 %v176, %v190
        %v197 = vmul.f32 %v177, %v190
        %v198 = vmul.f32 %v178, %v190
        %v199 = vmul.f32 %v179, %v190
        %v200 = vmul.f32 %v180, %v190
        %v201 = vmul.f32 %v181, %v190
        %v202 = vmul.f32 %v182, %v190
        %v203 = vmul.f32 %v183, %v190
        %v204 = vmul.f32 %v184, %v190
        %v205 = vmul.f32 %v185, %v190
        %v206 = vmul.f32 %v186, %v190
        %v207 = vmul.f32 %v187, %v190
        %v208 = vld [vmem:[%s1] sm:$0x1]
        %v210 = vperm.slane %v208, 0
        %v212 = vadd.f32 %v192, %v210
        %v213 = vadd.f32 %v193, %v210
        %v214 = vadd.f32 %v194, %v210
        %v215 = vadd.f32 %v195, %v210
        %v216 = vadd.f32 %v196, %v210
        %v217 = vadd.f32 %v197, %v210
        %v218 = vadd.f32 %v198, %v210
        %v219 = vadd.f32 %v199, %v210
        %v220 = vadd.f32 %v200, %v210
        %v221 = vadd.f32 %v201, %v210
        %v222 = vadd.f32 %v202, %v210
        %v223 = vadd.f32 %v203, %v210
        %v224 = vadd.f32 %v204, %v210
        %v225 = vadd.f32 %v205, %v210
        %v226 = vadd.f32 %v206, %v210
        %v227 = vadd.f32 %v207, %v210
        %228 = vst [vmem:[%s164] sm:$0xff] %v212
        %229 = vst [vmem:[%s164 + $0x8] sm:$0xff] %v213
        %230 = vst [vmem:[%s164 + $0x10] sm:$0xff] %v214
        %231 = vst [vmem:[%s164 + $0x18] sm:$0xff] %v215
        %232 = vst [vmem:[%s164 + $0x20] sm:$0xff] %v216
        %233 = vst [vmem:[%s164 + $0x28] sm:$0xff] %v217
        %234 = vst [vmem:[%s164 + $0x30] sm:$0xff] %v218
        %235 = vst [vmem:[%s164 + $0x38] sm:$0xff] %v219
        %236 = vst [vmem:[%s164 + $0x40] sm:$0xff] %v220
        %237 = vst [vmem:[%s164 + $0x48] sm:$0xff] %v221
        %238 = vst [vmem:[%s164 + $0x50] sm:$0xff] %v222
        %239 = vst [vmem:[%s164 + $0x58] sm:$0xff] %v223
        %240 = vst [vmem:[%s164 + $0x60] sm:$0xff] %v224
        %241 = vst [vmem:[%s164 + $0x68] sm:$0xff] %v225
        %242 = vst [vmem:[%s164 + $0x70] sm:$0xff] %v226
        %243 = vst [vmem:[%s164 + $0x78] sm:$0xff] %v227
        %s244 = sand.u32 %s93, 1
        %s245 = scalar_lea.sflag [#allocation3], %s244
        %s246 = sand.u32 %s93, 1
        %s247 = smul.addr %s246, 128
        %s248 = scalar_lea.vmem [#allocation2], %s247
        // Predicated region
        $region33: #{fused_module.5} parent=31 // pred_check
          %p249 = pneg %p103
        $region34: #{fused_module.5} parent=31 // pred_check_branch
          %251 = sbr.rel (%p249) target = $region36
        $region35: #{fused_module.5} parent=31 // pred_region
          %s252 = smul.u32 16, %s17
          %254 = vsyncadd %s245, 0
          %s255 = smul.addr %s252, 8
          %s256 = scalar_lea.hbm %s3, %s255
          %s257 = sshll.u32 %s248, 4
          %s258 = int_to_ptr.vmem [resolvable:$true] %s257
          %s259 = sshll.u32 %s256, 4
          %s260 = int_to_ptr.hbm [resolvable:$true] %s259
          %265 = dma.vmem_to_hbm [thread:$0]  %s258, 2048, %s260, %s245, 128, 128, 8
        $region36: #{fused_module.5} parent=31 // pred_fallthru
          _
      $region32: #{fused_module.5} parent=5 // pred_fallthru
        _
      %p266 = scmp.le.s32.totalorder 2, %s12
      // Predicated region
      $region37: #{fused_module.5} parent=5 // pred_check
        %p267 = pneg %p266
      $region38: #{fused_module.5} parent=5 // pred_check_branch
        %269 = sbr.rel (%p267) target = $region40
      $region39: #{fused_module.5} parent=5 // pred_region
        %s270 = ssub.s32 %s12, 2
        // Predicated region
        $region41: #{fused_module.5} parent=39 // pred_check
          %p271 = pneg %p109
        $region42: #{fused_module.5} parent=39 // pred_check_branch
          %273 = sbr.rel (%p271) target = $region44
        $region43: #{fused_module.5} parent=39 // pred_region
          %s274 = sand.u32 %s94, 1
          %s275 = scalar_lea.sflag [#allocation3], %s274
          %s276 = sand.u32 %s94, 1
          %s277 = smul.addr %s276, 128
          %s278 = scalar_lea.vmem [#allocation2], %s277
          %280 = dma.done %s275, 2048
        $region44: #{fused_module.5} parent=39 // pred_fallthru
          _
      $region40: #{fused_module.5} parent=5 // pred_fallthru
        _
    $region6: #{fused_module.5} parent=1 // loop_footer
      %s16 = sadd.s32 1, %s12
    $region7: #{fused_module.5} parent=1 // loop_footer_branch
      %11 = sbr.rel target = $region3
    $region8: #{fused_module.5} parent=1 // loop_exit
      _
    %281 = vsyncpa [#allocation3], 1
    %s282 = scalar_lea.sflag [#allocation3], 1
    %283 = vsyncpa %s282, 1

// kernel: fused_module.4
$region0: #{fused_module.4}
  #allocation0 [shape = 'u32[]', space=smem, size = 0x4, offset = 0x4, fixed_abs, tag = 'smem constant byte address 0x4 - core index']
  #allocation1 [shape = 'u32[72,128]{1,0:T(1,128)}', space=vmem, size = 0x9000, scoped, tag = 'internal scratch']
  %s0 = inlined_call_operand.vmem [shape: f32[1,256], index: 0, kind: input, shape index: {}]
  %s1 = inlined_call_operand.vmem [shape: f32[1,256], index: 1, kind: input, shape index: {}]
  %s2 = inlined_call_operand.hbm [shape: f32[512,256], index: 2, kind: input, shape index: {}]
  %s3 = inlined_call_operand.hbm [shape: f32[512,256], index: 3, kind: input, shape index: {}]
  %s4 = inlined_call_operand.vmem [shape: bf16[256,128], index: 4, kind: input, shape index: {}]
  %s5 = inlined_call_operand.vmem [shape: f32[512,128], index: 5, kind: output, shape index: {0}]
  %s6 = inlined_call_operand.vmem [shape: f32[2,128], index: 6, kind: output, shape index: {1}]
  %7 = xla_tuple %s5, %s6
  %s8 = sld [smem:[#allocation0]]
  $region73: #{fused_module.4} parent=0
    _
  %s10 = ssub.s32 1, %s8
  %s11 = scalar_select 0, %s10, %s8
  $region1: #{fused_module.4} parent=0
    #allocation2 [shape = 'u8[262144]{0}', space=vmem, size = 0x40000, scoped, tag = 'input window, operand 2']
    #allocation3 [shape = 's32[2]{0}', space=sflag, size = 0x8, scoped, tag = 'scoped memory for fused_module.4']
    #allocation4 [shape = 'u8[262144]{0}', space=vmem, size = 0x40000, scoped, tag = 'input window, operand 3']
    #allocation5 [shape = 's32[2]{0}', space=sflag, size = 0x8, scoped, tag = 'scoped memory for fused_module.4']
    %12 = vsyncpa [#allocation3], 0
    %s13 = scalar_lea.sflag [#allocation3], 1
    %14 = vsyncpa %s13, 0
    %15 = vsyncpa [#allocation5], 0
    %s16 = scalar_lea.sflag [#allocation5], 1
    %17 = vsyncpa %s16, 0
    loop: start=0, step=1, limit=6
    $region2: #{fused_module.4} parent=1 // loop_pre_header
      _
    $region3: #{fused_module.4} parent=1 // loop_header
      %s19 = sphi 0, %s23
      %p20 = scmp.ge.s32.totalorder %s19, 6
      %s27 = sphi 0, %s27
      %s29 = sphi 0, %s27
      %s30 = sphi 0, %s29
      %s44 = sphi 0, %s30
      %s48 = sphi 0, %s48
      %s50 = sphi 0, %s48
      %s51 = sphi 0, %s50
      %s65 = sphi 0, %s51
      %s71 = sphi 0, %s73
      %s74 = sphi 0, %s71
      %s75 = sphi 0, %s74
      %s91 = sphi 0, %s75
      %s97 = sphi 0, %s99
      %s100 = sphi 0, %s97
      %s101 = sphi 0, %s100
      %s117 = sphi 0, %s101
      %s121 = sphi 0, %s121
      %s123 = sphi 0, %s121
      %s124 = sphi 0, %s123
      %s138 = sphi 0, %s124
      %s144 = sphi 0, %s146
      %s147 = sphi 0, %s144
      %s148 = sphi 0, %s147
      %s164 = sphi 0, %s148
      %s168 = sphi 0, %s168
      %s170 = sphi 0, %s168
      %s171 = sphi 0, %s170
      %s185 = sphi 0, %s171
    $region4: #{fused_module.4} parent=1 // loop_header_branch
      %22 = sbr.rel (%p20) target = $region8
    $region5: #{fused_module.4} parent=1 // loop_body
      %s24 = ssub.s32 %s19, 1
      %s25 = ssub.s32 %s19, 2
      %s26 = sadd.s32 %s19, 1
      %s28 = sadd.s32 %s27, 1
      %p31 = scmp.eq.s32.totalorder %s19, 3
      %p32 = scmp.ne.s32.totalorder %s27, %s29
      %p33 = scmp.eq.s32.totalorder %s19, 0
      %p34 = por %p32, %p33
      %p35 = scmp.ne.s32.totalorder %s27, %s29
      %p36 = scmp.eq.s32.totalorder %s24, 3
      %p37 = por %p35, %p36
      %p38 = scmp.ne.s32.totalorder %s29, %s30
      %p39 = scmp.eq.s32.totalorder %s24, 0
      %p40 = por %p38, %p39
      %p41 = scmp.ne.s32.totalorder %s29, %s30
      %p42 = scmp.eq.s32.totalorder %s25, 3
      %p43 = por %p41, %p42
      %p45 = scmp.ne.s32.totalorder %s30, %s44
      %p46 = scmp.eq.s32.totalorder %s25, 0
      %p47 = por %p45, %p46
      %s49 = sadd.s32 %s48, 1
      %p52 = scmp.eq.s32.totalorder %s19, 3
      %p53 = scmp.ne.s32.totalorder %s48, %s50
      %p54 = scmp.eq.s32.totalorder %s19, 0
      %p55 = por %p53, %p54
      %p56 = scmp.ne.s32.totalorder %s48, %s50
      %p57 = scmp.eq.s32.totalorder %s24, 3
      %p58 = por %p56, %p57
      %p59 = scmp.ne.s32.totalorder %s50, %s51
      %p60 = scmp.eq.s32.totalorder %s24, 0
      %p61 = por %p59, %p60
      %p62 = scmp.ne.s32.totalorder %s50, %s51
      %p63 = scmp.eq.s32.totalorder %s25, 3
      %p64 = por %p62, %p63
      %p66 = scmp.ne.s32.totalorder %s51, %s65
      %p67 = scmp.eq.s32.totalorder %s25, 0
      %p68 = por %p66, %p67
      %s69 = ssub.s32 %s19, %s26
      %p70 = scmp.eq.s32.totalorder %s69, 0
      %s72 = sadd.s32 %s71, 1
      %s73 = scalar_select %p70, %s71, %s72
      %p76 = pneg %p70
      %p77 = scmp.eq.s32.totalorder %s19, 3
      %p78 = por %p76, %p77
      %p79 = scmp.ne.s32.totalorder %s71, %s74
      %p80 = scmp.eq.s32.totalorder %s19, 0
      %p81 = por %p79, %p80
      %p82 = scmp.ne.s32.totalorder %s71, %s74
      %p83 = scmp.eq.s32.totalorder %s24, 3
      %p84 = por %p82, %p83
      %p85 = scmp.ne.s32.totalorder %s74, %s75
      %p86 = scmp.eq.s32.totalorder %s24, 0
      %p87 = por %p85, %p86
      %p88 = scmp.ne.s32.totalorder %s74, %s75
      %p89 = scmp.eq.s32.totalorder %s25, 3
      %p90 = por %p88, %p89
      %p92 = scmp.ne.s32.totalorder %s75, %s91
      %p93 = scmp.eq.s32.totalorder %s25, 0
      %p94 = por %p92, %p93
      %s95 = ssub.s32 %s19, %s26
      %p96 = scmp.eq.s32.totalorder %s95, 0
      %s98 = sadd.s32 %s97, 1
      %s99 = scalar_select %p96, %s97, %s98
      %p102 = pneg %p96
      %p103 = scmp.eq.s32.totalorder %s19, 3
      %p104 = por %p102, %p103
      %p105 = scmp.ne.s32.totalorder %s97, %s100
      %p106 = scmp.eq.s32.totalorder %s19, 0
      %p107 = por %p105, %p106
      %p108 = scmp.ne.s32.totalorder %s97, %s100
      %p109 = scmp.eq.s32.totalorder %s24, 3
      %p110 = por %p108, %p109
      %p111 = scmp.ne.s32.totalorder %s100, %s101
      %p112 = scmp.eq.s32.totalorder %s24, 0
      %p113 = por %p111, %p112
      %p114 = scmp.ne.s32.totalorder %s100, %s101
      %p115 = scmp.eq.s32.totalorder %s25, 3
      %p116 = por %p114, %p115
      %p118 = scmp.ne.s32.totalorder %s101, %s117
      %p119 = scmp.eq.s32.totalorder %s25, 0
      %p120 = por %p118, %p119
      %s122 = sadd.s32 %s121, 1
      %p125 = scmp.eq.s32.totalorder %s19, 3
      %p126 = scmp.ne.s32.totalorder %s121, %s123
      %p127 = scmp.eq.s32.totalorder %s19, 0
      %p128 = por %p126, %p127
      %p129 = scmp.ne.s32.totalorder %s121, %s123
      %p130 = scmp.eq.s32.totalorder %s24, 3
      %p131 = por %p129, %p130
      %p132 = scmp.ne.s32.totalorder %s123, %s124
      %p133 = scmp.eq.s32.totalorder %s24, 0
      %p134 = por %p132, %p133
      %p135 = scmp.ne.s32.totalorder %s123, %s124
      %p136 = scmp.eq.s32.totalorder %s25, 3
      %p137 = por %p135, %p136
      %p139 = scmp.ne.s32.totalorder %s124, %s138
      %p140 = scmp.eq.s32.totalorder %s25, 0
      %p141 = por %p139, %p140
      %s142 = ssub.s32 %s19, %s26
      %p143 = scmp.eq.s32.totalorder %s142, 0
      %s145 = sadd.s32 %s144, 1
      %s146 = scalar_select %p143, %s144, %s145
      %p149 = pneg %p143
      %p150 = scmp.eq.s32.totalorder %s19, 3
      %p151 = por %p149, %p150
      %p152 = scmp.ne.s32.totalorder %s144, %s147
      %p153 = scmp.eq.s32.totalorder %s19, 0
      %p154 = por %p152, %p153
      %p155 = scmp.ne.s32.totalorder %s144, %s147
      %p156 = scmp.eq.s32.totalorder %s24, 3
      %p157 = por %p155, %p156
      %p158 = scmp.ne.s32.totalorder %s147, %s148
      %p159 = scmp.eq.s32.totalorder %s24, 0
      %p160 = por %p158, %p159
      %p161 = scmp.ne.s32.totalorder %s147, %s148
      %p162 = scmp.eq.s32.totalorder %s25, 3
      %p163 = por %p161, %p162
      %p165 = scmp.ne.s32.totalorder %s148, %s164
      %p166 = scmp.eq.s32.totalorder %s25, 0
      %p167 = por %p165, %p166
      %s169 = sadd.s32 %s168, 1
      %p172 = scmp.eq.s32.totalorder %s19, 3
      %p173 = scmp.ne.s32.totalorder %s168, %s170
      %p174 = scmp.eq.s32.totalorder %s19, 0
      %p175 = por %p173, %p174
      %p176 = scmp.ne.s32.totalorder %s168, %s170
      %p177 = scmp.eq.s32.totalorder %s24, 3
      %p178 = por %p176, %p177
      %p179 = scmp.ne.s32.totalorder %s170, %s171
      %p180 = scmp.eq.s32.totalorder %s24, 0
      %p181 = por %p179, %p180
      %p182 = scmp.ne.s32.totalorder %s170, %s171
      %p183 = scmp.eq.s32.totalorder %s25, 3
      %p184 = por %p182, %p183
      %p186 = scmp.ne.s32.totalorder %s171, %s185
      %p187 = scmp.eq.s32.totalorder %s25, 0
      %p188 = por %p186, %p187
      %p189 = scmp.le.s32.totalorder 1, %s19
      %p190 = scmp.lt.s32.totalorder %s19, 5
      %p191 = pnand %p189, %p190
      %p192 = pneg %p191
      // Predicated region
      $region9: #{fused_module.4} parent=5 // pred_check
        _
      $region10: #{fused_module.4} parent=5 // pred_check_branch
        %194 = sbr.rel (%p191) target = $region12
      $region11: #{fused_module.4} parent=5 // pred_region
        %s195 = ssub.s32 %s19, 1
        // Predicated region
        $region13: #{fused_module.4} parent=11 // pred_check
          %p196 = pneg %p40
        $region14: #{fused_module.4} parent=11 // pred_check_branch
          %198 = sbr.rel (%p196) target = $region16
        $region15: #{fused_module.4} parent=11 // pred_region
          _
        $region16: #{fused_module.4} parent=11 // pred_fallthru
          _
        // Predicated region
        $region17: #{fused_module.4} parent=11 // pred_check
          %p199 = pneg %p61
        $region18: #{fused_module.4} parent=11 // pred_check_branch
          %201 = sbr.rel (%p199) target = $region20
        $region19: #{fused_module.4} parent=11 // pred_region
          _
        $region20: #{fused_module.4} parent=11 // pred_fallthru
          _
        // Predicated region
        $region21: #{fused_module.4} parent=11 // pred_check
          %p202 = pneg %p134
        $region22: #{fused_module.4} parent=11 // pred_check_branch
          %204 = sbr.rel (%p202) target = $region24
        $region23: #{fused_module.4} parent=11 // pred_region
          _
        $region24: #{fused_module.4} parent=11 // pred_fallthru
          _
      $region12: #{fused_module.4} parent=5 // pred_fallthru
        _
      %p205 = scmp.lt.s32.totalorder %s19, 4
      // Predicated region
      $region25: #{fused_module.4} parent=5 // pred_check
        %p206 = pneg %p205
      $region26: #{fused_module.4} parent=5 // pred_check_branch
        %208 = sbr.rel (%p206) target = $region28
      $region27: #{fused_module.4} parent=5 // pred_region
        // Predicated region
        $region29: #{fused_module.4} parent=27 // pred_check
          %p209 = pneg %p81
        $region30: #{fused_module.4} parent=27 // pred_check_branch
          %211 = sbr.rel (%p209) target = $region32
        $region31: #{fused_module.4} parent=27 // pred_region
          %s212 = sand.u32 %s71, 1
          %s213 = scalar_lea.sflag [#allocation3], %s212
          %s214 = sand.u32 %s71, 1
          %s215 = smul.addr %s214, 256
          %s216 = scalar_lea.vmem [#allocation2], %s215
          %s217 = smul.u32 16, %s19
          %219 = vsyncadd %s213, 0
          %s220 = smul.addr %s217, 2
          %s221 = smul.addr %s220, 8
          %s222 = scalar_lea.hbm %s2, %s221
          %s223 = sshll.u32 %s222, 4
          %s224 = int_to_ptr.hbm [resolvable:$true] %s223
          %s225 = sshll.u32 %s216, 4
          %s226 = int_to_ptr.vmem [resolvable:$true] %s225
          %231 = dma.hbm_to_vmem [thread:$0]  %s224, 4096, %s226, %s213, 256, 256, 16
        $region32: #{fused_module.4} parent=27 // pred_fallthru
          _
        // Predicated region
        $region33: #{fused_module.4} parent=27 // pred_check
          %p232 = pneg %p107
        $region34: #{fused_module.4} parent=27 // pred_check_branch
          %234 = sbr.rel (%p232) target = $region36
        $region35: #{fused_module.4} parent=27 // pred_region
          %s235 = sand.u32 %s97, 1
          %s236 = scalar_lea.sflag [#allocation5], %s235
          %s237 = sand.u32 %s97, 1
          %s238 = smul.addr %s237, 256
          %s239 = scalar_lea.vmem [#allocation4], %s238
          %s240 = smul.u32 16, %s19
          %242 = vsyncadd %s236, 0
          %s243 = smul.addr %s240, 2
          %s244 = smul.addr %s243, 8
          %s245 = scalar_lea.hbm %s3, %s244
          %s246 = sshll.u32 %s245, 4
          %s247 = int_to_ptr.hbm [resolvable:$true] %s246
          %s248 = sshll.u32 %s239, 4
          %s249 = int_to_ptr.vmem [resolvable:$true] %s248
          %254 = dma.hbm_to_vmem [thread:$0]  %s247, 4096, %s249, %s236, 256, 256, 16
        $region36: #{fused_module.4} parent=27 // pred_fallthru
          _
      $region28: #{fused_module.4} parent=5 // pred_fallthru
        _
      %p255 = scmp.le.s32.totalorder 1, %s19
      %p256 = scmp.lt.s32.totalorder %s19, 5
      %p257 = pnand %p255, %p256
      %p258 = pneg %p257
      // Predicated region
      $region37: #{fused_module.4} parent=5 // pred_check
        _
      $region38: #{fused_module.4} parent=5 // pred_check_branch
        %260 = sbr.rel (%p257) target = $region40
      $region39: #{fused_module.4} parent=5 // pred_region
        %s261 = ssub.s32 %s19, 1
        %s262 = sand.u32 %s74, 1
        %s263 = scalar_lea.sflag [#allocation3], %s262
        %s264 = sand.u32 %s74, 1
        %s265 = smul.addr %s264, 256
        %s266 = scalar_lea.vmem [#allocation2], %s265
        // Predicated region
        $region41: #{fused_module.4} parent=39 // pred_check
          %p267 = pneg %p87
        $region42: #{fused_module.4} parent=39 // pred_check_branch
          %269 = sbr.rel (%p267) target = $region44
        $region43: #{fused_module.4} parent=39 // pred_region
          %271 = dma.done %s263, 4096
        $region44: #{fused_module.4} parent=39 // pred_fallthru
          _
        %s272 = sand.u32 %s100, 1
        %s273 = scalar_lea.sflag [#allocation5], %s272
        %s274 = sand.u32 %s100, 1
        %s275 = smul.addr %s274, 256
        %s276 = scalar_lea.vmem [#allocation4], %s275
        // Predicated region
        $region45: #{fused_module.4} parent=39 // pred_check
          %p277 = pneg %p113
        $region46: #{fused_module.4} parent=39 // pred_check_branch
          %279 = sbr.rel (%p277) target = $region48
        $region47: #{fused_module.4} parent=39 // pred_region
          %281 = dma.done %s273, 4096
        $region48: #{fused_module.4} parent=39 // pred_fallthru
          _
        %p282 = pneg %p40
        %p283 = pneg %p37
        %p284 = pneg %p61
        %p285 = pneg %p58
        %s286 = sand.u32 %s74, 1
        %s287 = scalar_lea.sflag [#allocation3], %s286
        %s288 = sand.u32 %s74, 1
        %s289 = smul.addr %s288, 256
        %s290 = scalar_lea.vmem [#allocation2], %s289
        %p291 = pneg %p87
        %p292 = pneg %p84
        %s293 = sand.u32 %s100, 1
        %s294 = scalar_lea.sflag [#allocation5], %s293
        %s295 = sand.u32 %s100, 1
        %s296 = smul.addr %s295, 256
        %s297 = scalar_lea.vmem [#allocation4], %s296
        %p298 = pneg %p113
        %p299 = pneg %p110
        %p300 = pneg %p134
        %p301 = pneg %p131
        %p302 = pneg %p160
        %p303 = pneg %p157
        %s304 = smul.u32 16, %s24
        %p305 = scmp.lt.s32.totalorder %s304, 63
        %s306 = scalar_select %p305, %s304, 63
        %s307 = smul.addr %s306, 8
        %s308 = scalar_lea.vmem %s5, %s307
        %p309 = pneg %p181
        %p310 = pneg %p178
        %s311 = smul.u32 16, %s24
        %s312 = smul.u32 16, %s24
        %s313 = smul.u32 16, %s24
        %p314 = scmp.lt.s32.totalorder %s313, 63
        %s315 = scalar_select %p314, %s313, 63
        %s316 = smul.addr %s315, 8
        %s317 = scalar_lea.vmem %s5, %s316
        %s318 = smul.u32 16, %s24
        %p319 = scmp.eq.s32.totalorder %s24, 0
        // Predicated region
        $region49: #{fused_module.4} parent=39 // pred_check
          %p320 = pneg %p319
        $region50: #{fused_module.4} parent=39 // pred_check_branch
          %322 = sbr.rel (%p320) target = $region52
        $region51: #{fused_module.4} parent=39 // pred_region
          %323 = vst [vmem:[%s6] sm:$0x3] 0.0
        $region52: #{fused_module.4} parent=39 // pred_fallthru
          _
        %v324 = vld [vmem:[%s266] sm:$0xff]
        %v325 = vld [vmem:[%s266 + $0x8] sm:$0xff]
        %v326 = vld [vmem:[%s266 + $0x10] sm:$0xff]
        %v327 = vld [vmem:[%s266 + $0x18] sm:$0xff]
        %v328 = vld [vmem:[%s266 + $0x20] sm:$0xff]
        %v329 = vld [vmem:[%s266 + $0x28] sm:$0xff]
        %v330 = vld [vmem:[%s266 + $0x30] sm:$0xff]
        %v331 = vld [vmem:[%s266 + $0x38] sm:$0xff]
        %v332 = vld [vmem:[%s266 + $0x40] sm:$0xff]
        %v333 = vld [vmem:[%s266 + $0x48] sm:$0xff]
        %v334 = vld [vmem:[%s266 + $0x50] sm:$0xff]
        %v335 = vld [vmem:[%s266 + $0x58] sm:$0xff]
        %v336 = vld [vmem:[%s266 + $0x60] sm:$0xff]
        %v337 = vld [vmem:[%s266 + $0x68] sm:$0xff]
        %v338 = vld [vmem:[%s266 + $0x70] sm:$0xff]
        %v339 = vld [vmem:[%s266 + $0x78] sm:$0xff]
        %v340 = vld [vmem:[%s266 + $0x80] sm:$0xff]
        %v341 = vld [vmem:[%s266 + $0x88] sm:$0xff]
        %v342 = vld [vmem:[%s266 + $0x90] sm:$0xff]
        %v343 = vld [vmem:[%s266 + $0x98] sm:$0xff]
        %v344 = vld [vmem:[%s266 + $0xa0] sm:$0xff]
        %v345 = vld [vmem:[%s266 + $0xa8] sm:$0xff]
        %v346 = vld [vmem:[%s266 + $0xb0] sm:$0xff]
        %v347 = vld [vmem:[%s266 + $0xb8] sm:$0xff]
        %v348 = vld [vmem:[%s266 + $0xc0] sm:$0xff]
        %v349 = vld [vmem:[%s266 + $0xc8] sm:$0xff]
        %v350 = vld [vmem:[%s266 + $0xd0] sm:$0xff]
        %v351 = vld [vmem:[%s266 + $0xd8] sm:$0xff]
        %v352 = vld [vmem:[%s266 + $0xe0] sm:$0xff]
        %v353 = vld [vmem:[%s266 + $0xe8] sm:$0xff]
        %v354 = vld [vmem:[%s266 + $0xf0] sm:$0xff]
        %v355 = vld [vmem:[%s266 + $0xf8] sm:$0xff]
        %v356 = vld [vmem:[%s0] sm:$0x3]
        %v358 = vperm.slane %v356, 0
        %v359 = vperm.slane %v356, 1
        %v362 = vmul.f32 %v324, %v358
        %v363 = vmul.f32 %v325, %v359
        %v364 = vmul.f32 %v326, %v358
        %v365 = vmul.f32 %v327, %v359
        %v366 = vmul.f32 %v328, %v358
        %v367 = vmul.f32 %v329, %v359
        %v368 = vmul.f32 %v330, %v358
        %v369 = vmul.f32 %v331, %v359
        %v370 = vmul.f32 %v332, %v358
        %v371 = vmul.f32 %v333, %v359
        %v372 = vmul.f32 %v334, %v358
        %v373 = vmul.f32 %v335, %v359
        %v374 = vmul.f32 %v336, %v358
        %v375 = vmul.f32 %v337, %v359
        %v376 = vmul.f32 %v338, %v358
        %v377 = vmul.f32 %v339, %v359
        %v378 = vmul.f32 %v340, %v358
        %v379 = vmul.f32 %v341, %v359
        %v380 = vmul.f32 %v342, %v358
        %v381 = vmul.f32 %v343, %v359
        %v382 = vmul.f32 %v344, %v358
        %v383 = vmul.f32 %v345, %v359
        %v384 = vmul.f32 %v346, %v358
        %v385 = vmul.f32 %v347, %v359
        %v386 = vmul.f32 %v348, %v358
        %v387 = vmul.f32 %v349, %v359
        %v388 = vmul.f32 %v350, %v358
        %v389 = vmul.f32 %v351, %v359
        %v390 = vmul.f32 %v352, %v358
        %v391 = vmul.f32 %v353, %v359
        %v392 = vmul.f32 %v354, %v358
        %v393 = vmul.f32 %v355, %v359
        %v394 = vld [vmem:[%s1] sm:$0x3]
        %v396 = vperm.slane %v394, 0
        %v397 = vperm.slane %v394, 1
        %v400 = vadd.f32 %v362, %v396
        %v401 = vadd.f32 %v363, %v397
        %v402 = vadd.f32 %v364, %v396
        %v403 = vadd.f32 %v365, %v397
        %v404 = vadd.f32 %v366, %v396
        %v405 = vadd.f32 %v367, %v397
        %v406 = vadd.f32 %v368, %v396
        %v407 = vadd.f32 %v369, %v397
        %v408 = vadd.f32 %v370, %v396
        %v409 = vadd.f32 %v371, %v397
        %v410 = vadd.f32 %v372, %v396
        %v411 = vadd.f32 %v373, %v397
        %v412 = vadd.f32 %v374, %v396
        %v413 = vadd.f32 %v375, %v397
        %v414 = vadd.f32 %v376, %v396
        %v415 = vadd.f32 %v377, %v397
        %v416 = vadd.f32 %v378, %v396
        %v417 = vadd.f32 %v379, %v397
        %v418 = vadd.f32 %v380, %v396
        %v419 = vadd.f32 %v381, %v397
        %v420 = vadd.f32 %v382, %v396
        %v421 = vadd.f32 %v383, %v397
        %v422 = vadd.f32 %v384, %v396
        %v423 = vadd.f32 %v385, %v397
        %v424 = vadd.f32 %v386, %v396
        %v425 = vadd.f32 %v387, %v397
        %v426 = vadd.f32 %v388, %v396
        %v427 = vadd.f32 %v389, %v397
        %v428 = vadd.f32 %v390, %v396
        %v429 = vadd.f32 %v391, %v397
        %v430 = vadd.f32 %v392, %v396
        %v431 = vadd.f32 %v393, %v397
        %v432 = vld [vmem:[%s276] sm:$0xff]
        %v433 = vld [vmem:[%s276 + $0x8] sm:$0xff]
        %v434 = vld [vmem:[%s276 + $0x10] sm:$0xff]
        %v435 = vld [vmem:[%s276 + $0x18] sm:$0xff]
        %v436 = vld [vmem:[%s276 + $0x20] sm:$0xff]
        %v437 = vld [vmem:[%s276 + $0x28] sm:$0xff]
        %v438 = vld [vmem:[%s276 + $0x30] sm:$0xff]
        %v439 = vld [vmem:[%s276 + $0x38] sm:$0xff]
        %v440 = vld [vmem:[%s276 + $0x40] sm:$0xff]
        %v441 = vld [vmem:[%s276 + $0x48] sm:$0xff]
        %v442 = vld [vmem:[%s276 + $0x50] sm:$0xff]
        %v443 = vld [vmem:[%s276 + $0x58] sm:$0xff]
        %v444 = vld [vmem:[%s276 + $0x60] sm:$0xff]
        %v445 = vld [vmem:[%s276 + $0x68] sm:$0xff]
        %v446 = vld [vmem:[%s276 + $0x70] sm:$0xff]
        %v447 = vld [vmem:[%s276 + $0x78] sm:$0xff]
        %v448 = vld [vmem:[%s276 + $0x80] sm:$0xff]
        %v449 = vld [vmem:[%s276 + $0x88] sm:$0xff]
        %v450 = vld [vmem:[%s276 + $0x90] sm:$0xff]
        %v451 = vld [vmem:[%s276 + $0x98] sm:$0xff]
        %v452 = vld [vmem:[%s276 + $0xa0] sm:$0xff]
        %v453 = vld [vmem:[%s276 + $0xa8] sm:$0xff]
        %v454 = vld [vmem:[%s276 + $0xb0] sm:$0xff]
        %v455 = vld [vmem:[%s276 + $0xb8] sm:$0xff]
        %v456 = vld [vmem:[%s276 + $0xc0] sm:$0xff]
        %v457 = vld [vmem:[%s276 + $0xc8] sm:$0xff]
        %v458 = vld [vmem:[%s276 + $0xd0] sm:$0xff]
        %v459 = vld [vmem:[%s276 + $0xd8] sm:$0xff]
        %v460 = vld [vmem:[%s276 + $0xe0] sm:$0xff]
        %v461 = vld [vmem:[%s276 + $0xe8] sm:$0xff]
        %v462 = vld [vmem:[%s276 + $0xf0] sm:$0xff]
        %v463 = vld [vmem:[%s276 + $0xf8] sm:$0xff]
        %v464 = vadd.f32 %v400, %v432
        %v465 = vadd.f32 %v401, %v433
        %v466 = vadd.f32 %v402, %v434
        %v467 = vadd.f32 %v403, %v435
        %v468 = vadd.f32 %v404, %v436
        %v469 = vadd.f32 %v405, %v437
        %v470 = vadd.f32 %v406, %v438
        %v471 = vadd.f32 %v407, %v439
        %v472 = vadd.f32 %v408, %v440
        %v473 = vadd.f32 %v409, %v441
        %v474 = vadd.f32 %v410, %v442
        %v475 = vadd.f32 %v411, %v443
        %v476 = vadd.f32 %v412, %v444
        %v477 = vadd.f32 %v413, %v445
        %v478 = vadd.f32 %v414, %v446
        %v479 = vadd.f32 %v415, %v447
        %v480 = vadd.f32 %v416, %v448
        %v481 = vadd.f32 %v417, %v449
        %v482 = vadd.f32 %v418, %v450
        %v483 = vadd.f32 %v419, %v451
        %v484 = vadd.f32 %v420, %v452
        %v485 = vadd.f32 %v421, %v453
        %v486 = vadd.f32 %v422, %v454
        %v487 = vadd.f32 %v423, %v455
        %v488 = vadd.f32 %v424, %v456
        %v489 = vadd.f32 %v425, %v457
        %v490 = vadd.f32 %v426, %v458
        %v491 = vadd.f32 %v427, %v459
        %v492 = vadd.f32 %v428, %v460
        %v493 = vadd.f32 %v429, %v461
        %v494 = vadd.f32 %v430, %v462
        %v495 = vadd.f32 %v431, %v463
        %v496 = vmax.f32 %v464, 0.0
        %v497 = vmax.f32 %v465, 0.0
        %v498 = vmax.f32 %v466, 0.0
        %v499 = vmax.f32 %v467, 0.0
        %v500 = vmax.f32 %v468, 0.0
        %v501 = vmax.f32 %v469, 0.0
        %v502 = vmax.f32 %v470, 0.0
        %v503 = vmax.f32 %v471, 0.0
        %v504 = vmax.f32 %v472, 0.0
        %v505 = vmax.f32 %v473, 0.0
        %v506 = vmax.f32 %v474, 0.0
        %v507 = vmax.f32 %v475, 0.0
        %v508 = vmax.f32 %v476, 0.0
        %v509 = vmax.f32 %v477, 0.0
        %v510 = vmax.f32 %v478, 0.0
        %v511 = vmax.f32 %v479, 0.0
        %v512 = vmax.f32 %v480, 0.0
        %v513 = vmax.f32 %v481, 0.0
        %v514 = vmax.f32 %v482, 0.0
        %v515 = vmax.f32 %v483, 0.0
        %v516 = vmax.f32 %v484, 0.0
        %v517 = vmax.f32 %v485, 0.0
        %v518 = vmax.f32 %v486, 0.0
        %v519 = vmax.f32 %v487, 0.0
        %v520 = vmax.f32 %v488, 0.0
        %v521 = vmax.f32 %v489, 0.0
        %v522 = vmax.f32 %v490, 0.0
        %v523 = vmax.f32 %v491, 0.0
        %v524 = vmax.f32 %v492, 0.0
        %v525 = vmax.f32 %v493, 0.0
        %v526 = vmax.f32 %v494, 0.0
        %v527 = vmax.f32 %v495, 0.0
        %v528 = vpack.c.bf16 %v498, %v496
        %v529 = vpack.c.bf16 %v499, %v497
        %v530 = vpack.c.bf16 %v502, %v500
        %v531 = vpack.c.bf16 %v503, %v501
        %v532 = vpack.c.bf16 %v506, %v504
        %v533 = vpack.c.bf16 %v507, %v505
        %v534 = vpack.c.bf16 %v510, %v508
        %v535 = vpack.c.bf16 %v511, %v509
        %v536 = vpack.c.bf16 %v514, %v512
        %v537 = vpack.c.bf16 %v515, %v513
        %v538 = vpack.c.bf16 %v518, %v516
        %v539 = vpack.c.bf16 %v519, %v517
        %v540 = vpack.c.bf16 %v522, %v520
        %v541 = vpack.c.bf16 %v523, %v521
        %v542 = vpack.c.bf16 %v526, %v524
        %v543 = vpack.c.bf16 %v527, %v525
        %v544 = vld [vmem:[%s4] sm:$0xf]
        %v545 = vld [vmem:[%s4 + $0x4] sm:$0xf]
        %v546 = vld [vmem:[%s4 + $0x8] sm:$0xf]
        %v547 = vld [vmem:[%s4 + $0xc] sm:$0xf]
        %v548 = vld [vmem:[%s4 + $0x10] sm:$0xf]
        %v549 = vld [vmem:[%s4 + $0x14] sm:$0xf]
        %v550 = vld [vmem:[%s4 + $0x18] sm:$0xf]
        %v551 = vld [vmem:[%s4 + $0x1c] sm:$0xf]
        %v552 = vld [vmem:[%s4 + $0x20] sm:$0xf]
        %v553 = vld [vmem:[%s4 + $0x24] sm:$0xf]
        %v554 = vld [vmem:[%s4 + $0x28] sm:$0xf]
        %v555 = vld [vmem:[%s4 + $0x2c] sm:$0xf]
        %v556 = vld [vmem:[%s4 + $0x30] sm:$0xf]
        %v557 = vld [vmem:[%s4 + $0x34] sm:$0xf]
        %v558 = vld [vmem:[%s4 + $0x38] sm:$0xf]
        %v559 = vld [vmem:[%s4 + $0x3c] sm:$0xf]
        %v560 = vld [vmem:[%s4 + $0x40] sm:$0xf]
        %v561 = vld [vmem:[%s4 + $0x44] sm:$0xf]
        %v562 = vld [vmem:[%s4 + $0x48] sm:$0xf]
        %v563 = vld [vmem:[%s4 + $0x4c] sm:$0xf]
        %v564 = vld [vmem:[%s4 + $0x50] sm:$0xf]
        %v565 = vld [vmem:[%s4 + $0x54] sm:$0xf]
        %v566 = vld [vmem:[%s4 + $0x58] sm:$0xf]
        %v567 = vld [vmem:[%s4 + $0x5c] sm:$0xf]
        %v568 = vld [vmem:[%s4 + $0x60] sm:$0xf]
        %v569 = vld [vmem:[%s4 + $0x64] sm:$0xf]
        %v570 = vld [vmem:[%s4 + $0x68] sm:$0xf]
        %v571 = vld [vmem:[%s4 + $0x6c] sm:$0xf]
        %v572 = vld [vmem:[%s4 + $0x70] sm:$0xf]
        %v573 = vld [vmem:[%s4 + $0x74] sm:$0xf]
        %v574 = vld [vmem:[%s4 + $0x78] sm:$0xf]
        %v575 = vld [vmem:[%s4 + $0x7c] sm:$0xf]
        %v608 = vunpack.c.l.b16 %v544
        %v609 = vunpack.c.l.b16 %v545
        %v610 = vunpack.c.l.b16 %v546
        %v611 = vunpack.c.l.b16 %v547
        %v612 = vunpack.c.l.b16 %v548
        %v613 = vunpack.c.l.b16 %v549
        %v614 = vunpack.c.l.b16 %v550
        %v615 = vunpack.c.l.b16 %v551
        %v616 = vunpack.c.l.b16 %v552
        %v617 = vunpack.c.l.b16 %v553
        %v618 = vunpack.c.l.b16 %v554
        %v619 = vunpack.c.l.b16 %v555
        %v620 = vunpack.c.l.b16 %v556
        %v621 = vunpack.c.l.b16 %v557
        %v622 = vunpack.c.l.b16 %v558
        %v623 = vunpack.c.l.b16 %v559
        %v624 = vunpack.c.l.b16 %v560
        %v625 = vunpack.c.l.b16 %v561
        %v626 = vunpack.c.l.b16 %v562
        %v627 = vunpack.c.l.b16 %v563
        %v628 = vunpack.c.l.b16 %v564
        %v629 = vunpack.c.l.b16 %v565
        %v630 = vunpack.c.l.b16 %v566
        %v631 = vunpack.c.l.b16 %v567
        %v632 = vunpack.c.l.b16 %v568
        %v633 = vunpack.c.l.b16 %v569
        %v634 = vunpack.c.l.b16 %v570
        %v635 = vunpack.c.l.b16 %v571
        %v636 = vunpack.c.l.b16 %v572
        %v637 = vunpack.c.l.b16 %v573
        %v638 = vunpack.c.l.b16 %v574
        %v639 = vunpack.c.l.b16 %v575
        %v640 = vpack.c.b16 %v609, %v608
        %v641 = vpack.c.b16 %v611, %v610
        %v642 = vpack.c.b16 %v613, %v612
        %v643 = vpack.c.b16 %v615, %v614
        %v644 = vpack.c.b16 %v617, %v616
        %v645 = vpack.c.b16 %v619, %v618
        %v646 = vpack.c.b16 %v621, %v620
        %v647 = vpack.c.b16 %v623, %v622
        %v648 = vpack.c.b16 %v625, %v624
        %v649 = vpack.c.b16 %v627, %v626
        %v650 = vpack.c.b16 %v629, %v628
        %v651 = vpack.c.b16 %v631, %v630
        %v652 = vpack.c.b16 %v633, %v632
        %v653 = vpack.c.b16 %v635, %v634
        %v654 = vpack.c.b16 %v637, %v636
        %v655 = vpack.c.b16 %v639, %v638
        %672 = vmatpush.bf16.msra.mxu0 %v647
        %673 = vmatpush.bf16.msra.mxu0 %v646
        %674 = vmatpush.bf16.msra.mxu0 %v645
        %675 = vmatpush.bf16.msra.mxu0 %v644
        %676 = vmatpush.bf16.msra.mxu0 %v643
        %677 = vmatpush.bf16.msra.mxu0 %v642
        %678 = vmatpush.bf16.msra.mxu0 %v641
        %679 = vmatpush.bf16.msra.mxu0 %v640
        %680 = vmatmul.bf16.gmra.mxu0 %v528
        %v681 = vpop.f32.mrf.mxu0
        %v682 = vadd.f32 0.0, %v681
        %v683 = vpop.f32.mrf.mxu0
        %v684 = vadd.f32 0.0, %v683
        %685 = vmatmul.bf16.gmra.mxu0 %v530
        %v686 = vpop.f32.mrf.mxu0
        %v687 = vadd.f32 0.0, %v686
        %v688 = vpop.f32.mrf.mxu0
        %v689 = vadd.f32 0.0, %v688
        %690 = vmatmul.bf16.gmra.mxu0 %v532
        %v691 = vpop.f32.mrf.mxu0
        %v692 = vadd.f32 0.0, %v691
        %v693 = vpop.f32.mrf.mxu0
        %v694 = vadd.f32 0.0, %v693
        %695 = vmatmul.bf16.gmra.mxu0 %v534
        %v696 = vpop.f32.mrf.mxu0
        %v697 = vadd.f32 0.0, %v696
        %v698 = vpop.f32.mrf.mxu0
        %v699 = vadd.f32 0.0, %v698
        %700 = vmatmul.bf16.gmra.mxu0 %v536
        %v701 = vpop.f32.mrf.mxu0
        %v702 = vadd.f32 0.0, %v701
        %v703 = vpop.f32.mrf.mxu0
        %v704 = vadd.f32 0.0, %v703
        %705 = vmatmul.bf16.gmra.mxu0 %v538
        %v706 = vpop.f32.mrf.mxu0
        %v707 = vadd.f32 0.0, %v706
        %v708 = vpop.f32.mrf.mxu0
        %v709 = vadd.f32 0.0, %v708
        %710 = vmatmul.bf16.gmra.mxu0 %v540
        %v711 = vpop.f32.mrf.mxu0
        %v712 = vadd.f32 0.0, %v711
        %v713 = vpop.f32.mrf.mxu0
        %v714 = vadd.f32 0.0, %v713
        %715 = vmatmul.bf16.gmra.mxu0 %v542
        %v716 = vpop.f32.mrf.mxu0
        %v717 = vadd.f32 0.0, %v716
        %v718 = vpop.f32.mrf.mxu0
        %v719 = vadd.f32 0.0, %v718
        %720 = vdwg.mxu0
        %721 = vmatpush.bf16.msra.mxu0 %v655
        %722 = vmatpush.bf16.msra.mxu0 %v654
        %723 = vmatpush.bf16.msra.mxu0 %v653
        %724 = vmatpush.bf16.msra.mxu0 %v652
        %725 = vmatpush.bf16.msra.mxu0 %v651
        %726 = vmatpush.bf16.msra.mxu0 %v650
        %727 = vmatpush.bf16.msra.mxu0 %v649
        %728 = vmatpush.bf16.msra.mxu0 %v648
        %729 = vmatmul.bf16.gmra.mxu0 %v529
        %v730 = vpop.f32.mrf.mxu0
        %v731 = vadd.f32 %v682, %v730
        %v732 = vpop.f32.mrf.mxu0
        %v733 = vadd.f32 %v684, %v732
        %734 = vmatmul.bf16.gmra.mxu0 %v531
        %v735 = vpop.f32.mrf.mxu0
        %v736 = vadd.f32 %v687, %v735
        %v737 = vpop.f32.mrf.mxu0
        %v738 = vadd.f32 %v689, %v737
        %739 = vmatmul.bf16.gmra.mxu0 %v533
        %v740 = vpop.f32.mrf.mxu0
        %v741 = vadd.f32 %v692, %v740
        %v742 = vpop.f32.mrf.mxu0
        %v743 = vadd.f32 %v694, %v742
        %744 = vmatmul.bf16.gmra.mxu0 %v535
        %v745 = vpop.f32.mrf.mxu0
        %v746 = vadd.f32 %v697, %v745
        %v747 = vpop.f32.mrf.mxu0
        %v748 = vadd.f32 %v699, %v747
        %749 = vmatmul.bf16.gmra.mxu0 %v537
        %v750 = vpop.f32.mrf.mxu0
        %v751 = vadd.f32 %v702, %v750
        %v752 = vpop.f32.mrf.mxu0
        %v753 = vadd.f32 %v704, %v752
        %754 = vmatmul.bf16.gmra.mxu0 %v539
        %v755 = vpop.f32.mrf.mxu0
        %v756 = vadd.f32 %v707, %v755
        %v757 = vpop.f32.mrf.mxu0
        %v758 = vadd.f32 %v709, %v757
        %759 = vmatmul.bf16.gmra.mxu0 %v541
        %v760 = vpop.f32.mrf.mxu0
        %v761 = vadd.f32 %v712, %v760
        %v762 = vpop.f32.mrf.mxu0
        %v763 = vadd.f32 %v714, %v762
        %764 = vmatmul.bf16.gmra.mxu0 %v543
        %v765 = vpop.f32.mrf.mxu0
        %v766 = vadd.f32 %v717, %v765
        %v767 = vpop.f32.mrf.mxu0
        %v768 = vadd.f32 %v719, %v767
        %769 = vdwg.mxu0
        %770 = vst [vmem:[%s317] sm:$0xff] %v731
        %771 = vst [vmem:[%s317 + $0x8] sm:$0xff] %v733
        %772 = vst [vmem:[%s317 + $0x10] sm:$0xff] %v736
        %773 = vst [vmem:[%s317 + $0x18] sm:$0xff] %v738
        %774 = vst [vmem:[%s317 + $0x20] sm:$0xff] %v741
        %775 = vst [vmem:[%s317 + $0x28] sm:$0xff] %v743
        %776 = vst [vmem:[%s317 + $0x30] sm:$0xff] %v746
        %777 = vst [vmem:[%s317 + $0x38] sm:$0xff] %v748
        %778 = vst [vmem:[%s317 + $0x40] sm:$0xff] %v751
        %779 = vst [vmem:[%s317 + $0x48] sm:$0xff] %v753
        %780 = vst [vmem:[%s317 + $0x50] sm:$0xff] %v756
        %781 = vst [vmem:[%s317 + $0x58] sm:$0xff] %v758
        %782 = vst [vmem:[%s317 + $0x60] sm:$0xff] %v761
        %783 = vst [vmem:[%s317 + $0x68] sm:$0xff] %v763
        %784 = vst [vmem:[%s317 + $0x70] sm:$0xff] %v766
        %785 = vst [vmem:[%s317 + $0x78] sm:$0xff] %v768
        %v786 = vadd.f32 %v731, %v733
        %v787 = vadd.f32 %v786, %v736
        %v788 = vadd.f32 %v787, %v738
        %v789 = vadd.f32 %v788, %v741
        %v790 = vadd.f32 %v789, %v743
        %v791 = vadd.f32 %v790, %v746
        %v792 = vadd.f32 %v791, %v748
        %v793 = vadd.f32 %v792, %v751
        %v794 = vadd.f32 %v793, %v753
        %v795 = vadd.f32 %v794, %v756
        %v796 = vadd.f32 %v795, %v758
        %v797 = vadd.f32 %v796, %v761
        %v798 = vadd.f32 %v797, %v763
        %v799 = vadd.f32 %v798, %v766
        %v800 = vadd.f32 %v799, %v768
        %v801 = vrot.slane %v800, 4
        %v802 = vadd.f32 %v800, %v801
        %v803 = vrot.slane %v802, 2
        %v804 = vadd.f32 %v802, %v803
        %v805 = vrot.slane %v804, 1
        %v806 = vadd.f32 %v804, %v805
        %v807 = vmul.f32 %v731, %v731
        %v808 = vmul.f32 %v733, %v733
        %v809 = vmul.f32 %v736, %v736
        %v810 = vmul.f32 %v738, %v738
        %v811 = vmul.f32 %v741, %v741
        %v812 = vmul.f32 %v743, %v743
        %v813 = vmul.f32 %v746, %v746
        %v814 = vmul.f32 %v748, %v748
        %v815 = vmul.f32 %v751, %v751
        %v816 = vmul.f32 %v753, %v753
        %v817 = vmul.f32 %v756, %v756
        %v818 = vmul.f32 %v758, %v758
        %v819 = vmul.f32 %v761, %v761
        %v820 = vmul.f32 %v763, %v763
        %v821 = vmul.f32 %v766, %v766
        %v822 = vmul.f32 %v768, %v768
        %v823 = vadd.f32 %v807, %v808
        %v824 = vadd.f32 %v823, %v809
        %v825 = vadd.f32 %v824, %v810
        %v826 = vadd.f32 %v825, %v811
        %v827 = vadd.f32 %v826, %v812
        %v828 = vadd.f32 %v827, %v813
        %v829 = vadd.f32 %v828, %v814
        %v830 = vadd.f32 %v829, %v815
        %v831 = vadd.f32 %v830, %v816
        %v832 = vadd.f32 %v831, %v817
        %v833 = vadd.f32 %v832, %v818
        %v834 = vadd.f32 %v833, %v819
        %v835 = vadd.f32 %v834, %v820
        %v836 = vadd.f32 %v835, %v821
        %v837 = vadd.f32 %v836, %v822
        %v838 = vrot.slane %v837, 4
        %v839 = vadd.f32 %v837, %v838
        %v840 = vrot.slane %v839, 2
        %v841 = vadd.f32 %v839, %v840
        %v842 = vrot.slane %v841, 1
        %v843 = vadd.f32 %v841, %v842
        %v844 = vld [vmem:[%s6] sm:$0x3]
        %vm845 = vcmask 1040384
        %v846 = vsel %vm845, %v806, %v843
        %v847 = vadd.f32 %v844, %v846
        %848 = vst [vmem:[%s6] sm:$0x3] %v847
        %s849 = smul.u32 16, %s24
        %p850 = scmp.lt.s32.totalorder %s849, 63
        %s851 = scalar_select %p850, %s849, 63
        %s852 = smul.addr %s851, 8
        %s853 = scalar_lea.vmem %s5, %s852
        // Predicated region
        $region53: #{fused_module.4} parent=39 // pred_check
          %p854 = pneg %p157
        $region54: #{fused_module.4} parent=39 // pred_check_branch
          %856 = sbr.rel (%p854) target = $region56
        $region55: #{fused_module.4} parent=39 // pred_region
          %s857 = smul.u32 16, %s24
        $region56: #{fused_module.4} parent=39 // pred_fallthru
          _
        // Predicated region
        $region57: #{fused_module.4} parent=39 // pred_check
          %p858 = pneg %p178
        $region58: #{fused_module.4} parent=39 // pred_check_branch
          %860 = sbr.rel (%p858) target = $region60
        $region59: #{fused_module.4} parent=39 // pred_region
          _
        $region60: #{fused_module.4} parent=39 // pred_fallthru
          _
        // Predicated region
        $region61: #{fused_module.4} parent=39 // pred_check
          %p861 = pneg %p178
        $region62: #{fused_module.4} parent=39 // pred_check_branch
          %863 = sbr.rel (%p861) target = $region64
        $region63: #{fused_module.4} parent=39 // pred_region
          _
        $region64: #{fused_module.4} parent=39 // pred_fallthru
          _
      $region40: #{fused_module.4} parent=5 // pred_fallthru
        _
      %p864 = scmp.le.s32.totalorder 2, %s19
      // Predicated region
      $region65: #{fused_module.4} parent=5 // pred_check
        %p865 = pneg %p864
      $region66: #{fused_module.4} parent=5 // pred_check_branch
        %867 = sbr.rel (%p865) target = $region68
      $region67: #{fused_module.4} parent=5 // pred_region
        %s868 = ssub.s32 %s19, 2
        // Predicated region
        $region69: #{fused_module.4} parent=67 // pred_check
          %p869 = pneg %p163
        $region70: #{fused_module.4} parent=67 // pred_check_branch
          %871 = sbr.rel (%p869) target = $region72
        $region71: #{fused_module.4} parent=67 // pred_region
          %s872 = smul.u32 16, %s25
          %p873 = scmp.lt.s32.totalorder %s872, 63
          %s874 = scalar_select %p873, %s872, 63
          %s875 = smul.addr %s874, 8
          %s876 = scalar_lea.vmem %s5, %s875
        $region72: #{fused_module.4} parent=67 // pred_fallthru
          _
      $region68: #{fused_module.4} parent=5 // pred_fallthru
        _
    $region6: #{fused_module.4} parent=1 // loop_footer
      %s23 = sadd.s32 1, %s19
    $region7: #{fused_module.4} parent=1 // loop_footer_branch
      %18 = sbr.rel target = $region3
    $region8: #{fused_module.4} parent=1 // loop_exit
      _
    %877 = vsyncpa [#allocation3], 1
    %s878 = scalar_lea.sflag [#allocation3], 1
    %879 = vsyncpa %s878, 1
    %880 = vsyncpa [#allocation5], 1
    %s881 = scalar_lea.sflag [#allocation5], 1
    %882 = vsyncpa %s881, 1

</llo_original>
